<compile_context>
chip_gen: v6e
topology: v6e:2x2x1
jax: 0.10.0
libtpu: 0.0.40
codegen_flags: <defaults>
</compile_context>

<pallas_src>
import numpy as np
import jax
import jax.numpy as jnp
from jax.experimental import pallas as pl
from jax.experimental.pallas import tpu as pltpu

STATE_DIM = 4
ACTION_DIM = 6
IN_DIM = STATE_DIM + ACTION_DIM   # 10
NODES = 200                       # TrajNet MLP hidden width
H = 100                           # GRU hidden size

# lane-padded sizes
INP = 128                         # input features 10  -> 128
NP_ = 256                         # MLP hidden    200 -> 256
HP = 128                          # GRU hidden    100 -> 128 (also per-gate block width, l0/l1)
GP = 3 * HP                       # fused (r, z, n) gate width for l0/l1 = 384
OUTP = 128                        # output / l2 fused-gate block width
SLABW = INP + 3 * HP              # fused batch slab: [x | h0_l0 | h0_l1 | drop] = 512


def latentdeltanet_kernel(
    slab_ref, ymean_ref, ystd_ref,
    w1_ref, b1_ref, w2_ref, b2_ref, w3_ref, b3_ref,
    wih0_ref, whh0_ref, bih0_ref, bhh0_ref,
    wih1_ref, whh1_ref, bih1_ref, bhh1_ref,
    wih2_ref, bih2_ref, bhh2_ref,
    out_ref,
):
    f32 = jnp.float32
    bf16 = jnp.bfloat16

    def sig(v):                    # logistic via a single EUP tanh (instead of exp + reciprocal)
        return 0.5 * jnp.tanh(0.5 * v) + 0.5

    slab = slab_ref[...]                                   # (bm, 512) bf16, 128-lane-aligned sections
    x = slab[:, 0:INP]                                     # bf16 matmul operand (cols >= 10 are 0)
    h0a_bf = slab[:, INP:INP + HP]                         # l1-GRU layer-0 initial hidden (bf16)
    h0b_bf = slab[:, INP + HP:INP + 2 * HP]                # l1-GRU layer-1 initial hidden (bf16)
    drop = slab[:, INP + 2 * HP:INP + 3 * HP].astype(f32)  # {0, 1.25}: exact in bf16

    # --- TrajNet MLP + z_score_denorm_single ---
    h1 = jnp.maximum(jnp.dot(x, w1_ref[...], preferred_element_type=f32) + b1_ref[...], 0.0)
    h2 = jnp.maximum(jnp.dot(h1.astype(bf16), w2_ref[...], preferred_element_type=f32) + b2_ref[...], 0.0)
    delta = jnp.dot(h2.astype(bf16), w3_ref[...], preferred_element_type=f32) + b3_ref[...]
    delta = delta * ystd_ref[...] + ymean_ref[...]          # padded cols stay exactly 0

    # --- decoder GRU layers 0/1 (hidden 100): one fused (bm, 384) matmul per contribution ---
    def gru_step(x_bf, h_bf, wih_ref, whh_ref, bih_ref, bhh_ref):
        gi = jnp.dot(x_bf, wih_ref[...], preferred_element_type=f32) + bih_ref[...]
        gh = jnp.dot(h_bf, whh_ref[...], preferred_element_type=f32) + bhh_ref[...]
        r = sig(gi[:, 0 * HP:1 * HP] + gh[:, 0 * HP:1 * HP])
        z = sig(gi[:, 1 * HP:2 * HP] + gh[:, 1 * HP:2 * HP])
        n = jnp.tanh(gi[:, 2 * HP:3 * HP] + r * gh[:, 2 * HP:3 * HP])
        return (1.0 - z) * n + z * h_bf.astype(f32)

    h_l0 = gru_step(x, h0a_bf, wih0_ref, whh0_ref, bih0_ref, bhh0_ref)
    h_l0_bf = h_l0.astype(bf16)                             # single pack, reused by next matmul
    f1 = gru_step(h_l0_bf, h0b_bf, wih1_ref, whh1_ref, bih1_ref, bhh1_ref)
    mid_bf = (f1 * drop).astype(bf16)                       # F.dropout(f1, 0.2), training=True

    # --- decoder GRU layer 2 (hidden 4, zero initial hidden) ---
    # Gates packed into ONE 128-lane block: n @ cols 0:4, z @ {4:8, 124:128}, r @ {8:12, 120:124}.
    # One 128-wide MXU pass instead of 384; the mirrored r/z copies make the lane-roll alignment
    # below correct regardless of the hardware roll direction.
    gi2 = jnp.dot(mid_bf, wih2_ref[...], preferred_element_type=f32) + bih2_ref[...]
    bhh2 = bhh2_ref[...]
    s2 = sig(gi2 + bhh2)                                    # r2 at {8:12,120:124}, z2 at {4:8,124:128}
    r2 = pltpu.roll(s2, shift=8, axis=1)                    # r2 lands on cols 0:4
    z2 = pltpu.roll(s2, shift=4, axis=1)                    # z2 lands on cols 0:4
    n2 = jnp.tanh(gi2 + r2 * bhh2)                          # n gate lives at cols 0:4
    f2 = (1.0 - z2) * n2                                    # zero init hidden -> no whh2 / z*h term

    out_ref[...] = f2 + delta                               # only cols [0, STATE_DIM) are meaningful


def init_params(key):
    """Real (unpadded) parameters, PyTorch-shaped math, stored transposed as (in, out)."""
    ks = jax.random.split(key, 20)

    def u(k, shape, scale):
        return jax.random.uniform(k, shape, jnp.float32, -scale, scale)

    s_in = 1.0 / np.sqrt(IN_DIM)
    s_nd = 1.0 / np.sqrt(NODES)
    s_h = 1.0 / np.sqrt(H)
    s_s = 1.0 / np.sqrt(STATE_DIM)
    p = {
        # TrajNet MLP
        "w1": u(ks[0], (IN_DIM, NODES), s_in),
        "b1": u(ks[1], (NODES,), s_in),
        "w2": u(ks[2], (NODES, NODES), s_nd),
        "b2": u(ks[3], (NODES,), s_nd),
        "w3": u(ks[4], (NODES, STATE_DIM), s_nd),
        "b3": u(ks[5], (STATE_DIM,), s_nd),
        # GRU l1 (2 layers, hidden 100), gate order (r, z, n)
        "wih0": u(ks[6], (3, IN_DIM, H), s_h),
        "whh0": u(ks[7], (3, H, H), s_h),
        "bih0": u(ks[8], (3, H), s_h),
        "bhh0": u(ks[9], (3, H), s_h),
        "wih1": u(ks[10], (3, H, H), s_h),
        "whh1": u(ks[11], (3, H, H), s_h),
        "bih1": u(ks[12], (3, H), s_h),
        "bhh1": u(ks[13], (3, H), s_h),
        # GRU l2 (hidden 4). whh2 omitted: l2's initial hidden is always 0 in this forward,
        # so the h @ whh2 term never affects the output.
        "wih2": u(ks[14], (3, H, STATE_DIM), s_s),
        "bih2": u(ks[15], (3, STATE_DIM), s_s),
        "bhh2": u(ks[16], (3, STATE_DIM), s_s),
        # norms (only y_mean / y_std are used by LatentDeltaNet.forward)
        "y_mean": 0.1 * jax.random.normal(ks[17], (STATE_DIM,), jnp.float32),
        "y_std": 1.0 + 0.1 * jnp.abs(jax.random.normal(ks[18], (STATE_DIM,), jnp.float32)),
    }
    return p


def pack_params(p):
    """Zero-pad to lane multiples, fuse GRU gates, cast matmul weights to bf16."""
    pn = {k: np.asarray(v, np.float32) for k, v in p.items()}
    bf = jnp.bfloat16

    def pad2(a, rows, cols):
        out = np.zeros((rows, cols), np.float32)
        out[:a.shape[0], :a.shape[1]] = a
        return out

    def pad_row(a, cols):
        out = np.zeros((1, cols), np.float32)
        out[0, :a.shape[0]] = a
        return out

    def fuse_w(w, rows):                       # (3, in, n) -> (rows, 3*HP), gate g at cols [g*HP, ...)
        out = np.zeros((rows, GP), np.float32)
        for g in range(3):
            out[:w.shape[1], g * HP:g * HP + w.shape[2]] = w[g]
        return out

    def fuse_b(b):                             # (3, n) -> (1, 3*HP)
        out = np.zeros((1, GP), np.float32)
        for g in range(3):
            out[0, g * HP:g * HP + b.shape[1]] = b[g]
        return out

    def pack_l2(w, bi, bh):
        # Single 128-lane gate block.  Gate order in the raw params is (r, z, n) = (0, 1, 2).
        # n -> cols 0:4 ; z -> cols 4:8 and 124:128 ; r -> cols 8:12 and 120:124 (mirrored copies
        # so the kernel's lane-roll by 4 / 8 lands z2 / r2 on cols 0:4 for either roll direction).
        W = np.zeros((HP, OUTP), np.float32)
        Bi = np.zeros((1, OUTP), np.float32)
        Bh = np.zeros((1, OUTP), np.float32)
        gate_cols = {2: (0,), 1: (4, OUTP - 4), 0: (8, OUTP - 8)}
        for g, offs in gate_cols.items():
            for o in offs:
                W[:w.shape[1], o:o + w.shape[2]] = w[g]
                Bi[0, o:o + bi.shape[1]] = bi[g]
                Bh[0, o:o + bh.shape[1]] = bh[g]
        return W, Bi, Bh

    wih2, bih2, bhh2 = pack_l2(pn["wih2"], pn["bih2"], pn["bhh2"])

    return {
        "w1": jnp.asarray(pad2(pn["w1"], INP, NP_), bf),
        "b1": jnp.asarray(pad_row(pn["b1"], NP_)),
        "w2": jnp.asarray(pad2(pn["w2"], NP_, NP_), bf),
        "b2": jnp.asarray(pad_row(pn["b2"], NP_)),
        "w3": jnp.asarray(pad2(pn["w3"], NP_, OUTP), bf),
        "b3": jnp.asarray(pad_row(pn["b3"], OUTP)),
        "wih0": jnp.asarray(fuse_w(pn["wih0"], INP), bf),
        "whh0": jnp.asarray(fuse_w(pn["whh0"], HP), bf),
        "bih0": jnp.asarray(fuse_b(pn["bih0"])),
        "bhh0": jnp.asarray(fuse_b(pn["bhh0"])),
        "wih1": jnp.asarray(fuse_w(pn["wih1"], HP), bf),
        "whh1": jnp.asarray(fuse_w(pn["whh1"], HP), bf),
        "bih1": jnp.asarray(fuse_b(pn["bih1"])),
        "bhh1": jnp.asarray(fuse_b(pn["bhh1"])),
        "wih2": jnp.asarray(wih2, bf),
        "bih2": jnp.asarray(bih2),
        "bhh2": jnp.asarray(bhh2),
        "y_mean": jnp.asarray(pad_row(pn["y_mean"], OUTP)),
        "y_std": jnp.asarray(pad_row(pn["y_std"], OUTP)),
    }


_W_NAMES = ["w1", "b1", "w2", "b2", "w3", "b3",
            "wih0", "whh0", "bih0", "bhh0",
            "wih1", "whh1", "bih1", "bhh1",
            "wih2", "bih2", "bhh2"]


def _choose_tiling(B):
    """Adaptive (padded_batch, batch_tile): minimal padding for small B, >=2 grid steps for
    mid-size B (so v7x's two TensorCores both get work), large tiles for big B to amortize the
    ~0.35us per-grid-step overhead."""
    ru = lambda n, m: -(-n // m) * m
    if B <= 64:
        bp = max(ru(B, 8), 8)
        return bp, bp                    # one small sublane-aligned tile, no grid overhead
    if B < 1024:
        bp = ru(B, 16)
        return bp, bp // 2               # exactly 2 parallel steps (bp//2 is a multiple of 8)
    bm = 256 if B < 4096 else 512
    return ru(B, bm), bm


def latentdeltanet_forward(x, h0_l0, h0_l1, drop_mask, packed):
    """x: (B, 10) f32; h0_l0/h0_l1: (B, 100) f32; drop_mask: (B, 100) f32. Returns (B, 4) f32."""
    B = x.shape[0]
    Bp, bm = _choose_tiling(B)

    def pad(a, cols):
        a = jnp.asarray(a, jnp.float32)
        return jnp.pad(a, ((0, Bp - a.shape[0]), (0, cols - a.shape[1])))

    # One fused bf16 batch slab [x | h0_l0 | h0_l1 | drop] -> a single batch DMA stream per tile
    # and half the HBM bytes of separate f32 inputs.  Dropout values {0, 1.25} are exact in bf16;
    # the N(0,1) hidden init is re-sampled every forward anyway, so bf16 rounding is harmless.
    slab = jnp.concatenate(
        [pad(x, INP), pad(h0_l0, HP), pad(h0_l1, HP), pad(drop_mask, HP)], axis=1
    ).astype(jnp.bfloat16)

    weights = [packed[k] for k in _W_NAMES]

    def full_spec(a):
        # Constant index_map: block never changes across grid steps, so Pallas does not re-DMA it.
        return pl.BlockSpec(a.shape, lambda i, n=a.ndim: (0,) * n)

    in_specs = [pl.BlockSpec((bm, SLABW), lambda i: (i, 0)),
                full_spec(packed["y_mean"]), full_spec(packed["y_std"])]
    in_specs += [full_spec(w) for w in weights]

    out = pl.pallas_call(
        latentdeltanet_kernel,
        out_shape=jax.ShapeDtypeStruct((Bp, OUTP), jnp.float32),
        grid=(Bp // bm,),
        in_specs=in_specs,
        out_specs=pl.BlockSpec((bm, OUTP), lambda i: (i, 0)),
        compiler_params=pltpu.CompilerParams(dimension_semantics=("parallel",)),
    )(slab, packed["y_mean"], packed["y_std"], *weights)
    return out[:B, :STATE_DIM]


def latentdeltanet_reference(x, h0_l0, h0_l1, drop_mask, p):
    """Host reference on unpadded params; matmul operands (and the shipped bf16 h0/drop inputs)
    rounded to bf16 with f32 accumulation to match the kernel's numerics."""
    pn = {k: np.asarray(v, np.float32) for k, v in p.items()}

    def bf(a):
        return np.asarray(a, dtype=jnp.bfloat16).astype(np.float32)

    def mm(a, w):
        return bf(a) @ bf(w)

    def sigmoid(v):
        return 1.0 / (1.0 + np.exp(-v))

    x = np.asarray(x, np.float32)
    h0a = bf(h0_l0)            # kernel receives bf16 hidden-init noise
    h0b = bf(h0_l1)
    drop = bf(drop_mask)       # {0, 1.25} is exact in bf16

    # TrajNet MLP + z_score_denorm_single
    h1 = np.maximum(mm(x, pn["w1"]) + pn["b1"], 0.0)
    h2 = np.maximum(mm(h1, pn["w2"]) + pn["b2"], 0.0)
    delta = mm(h2, pn["w3"]) + pn["b3"]
    delta = delta * pn["y_std"] + pn["y_mean"]

    def gru(xin, h, wih, whh, bih, bhh):
        gi = [mm(xin, wih[g]) + bih[g] for g in range(3)]
        gh = [mm(h, whh[g]) + bhh[g] for g in range(3)]
        r = sigmoid(gi[0] + gh[0])
        z = sigmoid(gi[1] + gh[1])
        n = np.tanh(gi[2] + r * gh[2])
        return (1.0 - z) * n + z * h

    h_l0 = gru(x, h0a, pn["wih0"], pn["whh0"], pn["bih0"], pn["bhh0"])
    f1 = gru(h_l0, h0b, pn["wih1"], pn["whh1"], pn["bih1"], pn["bhh1"])
    mid = f1 * drop
    # GRU l2 with zero initial hidden
    gi2 = [mm(mid, pn["wih2"][g]) + pn["bih2"][g] for g in range(3)]
    r2 = sigmoid(gi2[0] + pn["bhh2"][0])
    z2 = sigmoid(gi2[1] + pn["bhh2"][1])
    n2 = np.tanh(gi2[2] + r2 * pn["bhh2"][2])
    f2 = (1.0 - z2) * n2

    return f2 + delta


if __name__ == "__main__":
    key = jax.random.PRNGKey(0)
    k_param, k_x, k_h, k_drop = jax.random.split(key, 4)
    params = init_params(k_param)
    packed = pack_params(params)

    B = 16
    x = jax.random.normal(k_x, (B, IN_DIM), jnp.float32)
    # initial hidden for the 2-layer l1 GRU: torch samples N(0,1) of shape (2, B, 100) every
    # forward; l2's initial hidden is sampled then multiplied by 0 -> zeros (handled in-kernel).
    h0 = jax.random.normal(k_h, (2, B, H), jnp.float32)
    h0_l0, h0_l1 = h0[0], h0[1]
    # F.dropout(f1, 0.2) with default training=True: keep prob 0.8, scale by 1/0.8
    keep = jax.random.bernoulli(k_drop, 0.8, (B, H))
    drop_mask = keep.astype(jnp.float32) / 0.8

    out = latentdeltanet_forward(x, h0_l0, h0_l1, drop_mask, packed)
    out = jax.block_until_ready(out)

    ref = latentdeltanet_reference(x, h0_l0, h0_l1, drop_mask, params)
    np.testing.assert_allclose(np.asarray(out), ref, rtol=5e-3, atol=5e-3)
    print("KERNEL_OK")
</pallas_src>

<mosaic_0001>
module attributes {stable_mosaic.version = 11 : i64} {
  func.func @latentdeltanet_kernel(%arg0: i32, %arg1: memref<16x512xbf16, #tpu.memory_space<vmem>>, %arg2: memref<1x128xf32, #tpu.memory_space<vmem>>, %arg3: memref<1x128xf32, #tpu.memory_space<vmem>>, %arg4: memref<128x256xbf16, #tpu.memory_space<vmem>>, %arg5: memref<1x256xf32, #tpu.memory_space<vmem>>, %arg6: memref<256x256xbf16, #tpu.memory_space<vmem>>, %arg7: memref<1x256xf32, #tpu.memory_space<vmem>>, %arg8: memref<256x128xbf16, #tpu.memory_space<vmem>>, %arg9: memref<1x128xf32, #tpu.memory_space<vmem>>, %arg10: memref<128x384xbf16, #tpu.memory_space<vmem>>, %arg11: memref<128x384xbf16, #tpu.memory_space<vmem>>, %arg12: memref<1x384xf32, #tpu.memory_space<vmem>>, %arg13: memref<1x384xf32, #tpu.memory_space<vmem>>, %arg14: memref<128x384xbf16, #tpu.memory_space<vmem>>, %arg15: memref<128x384xbf16, #tpu.memory_space<vmem>>, %arg16: memref<1x384xf32, #tpu.memory_space<vmem>>, %arg17: memref<1x384xf32, #tpu.memory_space<vmem>>, %arg18: memref<128x128xbf16, #tpu.memory_space<vmem>>, %arg19: memref<1x128xf32, #tpu.memory_space<vmem>>, %arg20: memref<1x128xf32, #tpu.memory_space<vmem>>, %arg21: memref<16x128xf32, #tpu.memory_space<vmem>>) attributes {dimension_semantics = [#tpu.dimension_semantics<parallel>], iteration_bounds = array<i64: 1>, scalar_prefetch = 0 : i64, scratch_operands = 0 : i64, tpu.core_type = #tpu.core_type<tc>, window_params = [{transform_indices = @transform_0, window_bounds = array<i64: 16, 512>}, {pipeline_mode = #tpu.pipeline_mode<synchronous>, transform_indices = @transform_1, window_bounds = array<i64: 1, 128>}, {pipeline_mode = #tpu.pipeline_mode<synchronous>, transform_indices = @transform_2, window_bounds = array<i64: 1, 128>}, {pipeline_mode = #tpu.pipeline_mode<synchronous>, transform_indices = @transform_3, window_bounds = array<i64: 128, 256>}, {pipeline_mode = #tpu.pipeline_mode<synchronous>, transform_indices = @transform_4, window_bounds = array<i64: 1, 256>}, {pipeline_mode = #tpu.pipeline_mode<synchronous>, transform_indices = @transform_5, window_bounds = array<i64: 256, 256>}, {pipeline_mode = #tpu.pipeline_mode<synchronous>, transform_indices = @transform_6, window_bounds = array<i64: 1, 256>}, {pipeline_mode = #tpu.pipeline_mode<synchronous>, transform_indices = @transform_7, window_bounds = array<i64: 256, 128>}, {pipeline_mode = #tpu.pipeline_mode<synchronous>, transform_indices = @transform_8, window_bounds = array<i64: 1, 128>}, {pipeline_mode = #tpu.pipeline_mode<synchronous>, transform_indices = @transform_9, window_bounds = array<i64: 128, 384>}, {pipeline_mode = #tpu.pipeline_mode<synchronous>, transform_indices = @transform_10, window_bounds = array<i64: 128, 384>}, {pipeline_mode = #tpu.pipeline_mode<synchronous>, transform_indices = @transform_11, window_bounds = array<i64: 1, 384>}, {pipeline_mode = #tpu.pipeline_mode<synchronous>, transform_indices = @transform_12, window_bounds = array<i64: 1, 384>}, {pipeline_mode = #tpu.pipeline_mode<synchronous>, transform_indices = @transform_13, window_bounds = array<i64: 128, 384>}, {pipeline_mode = #tpu.pipeline_mode<synchronous>, transform_indices = @transform_14, window_bounds = array<i64: 128, 384>}, {pipeline_mode = #tpu.pipeline_mode<synchronous>, transform_indices = @transform_15, window_bounds = array<i64: 1, 384>}, {pipeline_mode = #tpu.pipeline_mode<synchronous>, transform_indices = @transform_16, window_bounds = array<i64: 1, 384>}, {pipeline_mode = #tpu.pipeline_mode<synchronous>, transform_indices = @transform_17, window_bounds = array<i64: 128, 128>}, {pipeline_mode = #tpu.pipeline_mode<synchronous>, transform_indices = @transform_18, window_bounds = array<i64: 1, 128>}, {pipeline_mode = #tpu.pipeline_mode<synchronous>, transform_indices = @transform_19, window_bounds = array<i64: 1, 128>}, {transform_indices = @transform_20, window_bounds = array<i64: 16, 128>}]} {
    %c0 = arith.constant 0 : index
    %c0_0 = arith.constant 0 : index
    %0 = vector.load %arg1[%c0, %c0_0] : memref<16x512xbf16, #tpu.memory_space<vmem>>, vector<16x512xbf16>
    %1 = vector.extract_strided_slice %0 {offsets = [0, 0], sizes = [16, 128], strides = [1, 1]} : vector<16x512xbf16> to vector<16x128xbf16>
    %2 = vector.extract_strided_slice %0 {offsets = [0, 128], sizes = [16, 128], strides = [1, 1]} : vector<16x512xbf16> to vector<16x128xbf16>
    %3 = vector.extract_strided_slice %0 {offsets = [0, 256], sizes = [16, 128], strides = [1, 1]} : vector<16x512xbf16> to vector<16x128xbf16>
    %4 = vector.extract_strided_slice %0 {offsets = [0, 384], sizes = [16, 128], strides = [1, 1]} : vector<16x512xbf16> to vector<16x128xbf16>
    %5 = arith.extf %4 : vector<16x128xbf16> to vector<16x128xf32>
    %c0_1 = arith.constant 0 : index
    %c0_2 = arith.constant 0 : index
    %6 = vector.load %arg4[%c0_1, %c0_2] : memref<128x256xbf16, #tpu.memory_space<vmem>>, vector<128x256xbf16>
    %cst = arith.constant dense<0.000000e+00> : vector<16x256xf32>
    %7 = tpu.matmul %1, %6, %cst {dimension_numbers = #tpu.dot_dimension_numbers<[1], [0], [0], [1], [0, 0, 1, 1], [], []>} : vector<16x128xbf16>, vector<128x256xbf16>, vector<16x256xf32> -> vector<16x256xf32>
    %c0_3 = arith.constant 0 : index
    %c0_4 = arith.constant 0 : index
    %8 = vector.load %arg5[%c0_3, %c0_4] : memref<1x256xf32, #tpu.memory_space<vmem>>, vector<1x256xf32>
    %9 = vector.broadcast %8 : vector<1x256xf32> to vector<16x256xf32>
    %10 = arith.addf %7, %9 : vector<16x256xf32>
    %cst_5 = arith.constant 0.000000e+00 : f32
    %11 = vector.broadcast %cst_5 : f32 to vector<16x256xf32>
    %12 = arith.maximumf %10, %11 : vector<16x256xf32>
    %13 = arith.truncf %12 : vector<16x256xf32> to vector<16x256xbf16>
    %c0_6 = arith.constant 0 : index
    %c0_7 = arith.constant 0 : index
    %14 = vector.load %arg6[%c0_6, %c0_7] : memref<256x256xbf16, #tpu.memory_space<vmem>>, vector<256x256xbf16>
    %cst_8 = arith.constant dense<0.000000e+00> : vector<16x256xf32>
    %15 = tpu.matmul %13, %14, %cst_8 {dimension_numbers = #tpu.dot_dimension_numbers<[1], [0], [0], [1], [0, 0, 1, 1], [], []>} : vector<16x256xbf16>, vector<256x256xbf16>, vector<16x256xf32> -> vector<16x256xf32>
    %c0_9 = arith.constant 0 : index
    %c0_10 = arith.constant 0 : index
    %16 = vector.load %arg7[%c0_9, %c0_10] : memref<1x256xf32, #tpu.memory_space<vmem>>, vector<1x256xf32>
    %17 = vector.broadcast %16 : vector<1x256xf32> to vector<16x256xf32>
    %18 = arith.addf %15, %17 : vector<16x256xf32>
    %cst_11 = arith.constant 0.000000e+00 : f32
    %19 = vector.broadcast %cst_11 : f32 to vector<16x256xf32>
    %20 = arith.maximumf %18, %19 : vector<16x256xf32>
    %21 = arith.truncf %20 : vector<16x256xf32> to vector<16x256xbf16>
    %c0_12 = arith.constant 0 : index
    %c0_13 = arith.constant 0 : index
    %22 = vector.load %arg8[%c0_12, %c0_13] : memref<256x128xbf16, #tpu.memory_space<vmem>>, vector<256x128xbf16>
    %cst_14 = arith.constant dense<0.000000e+00> : vector<16x128xf32>
    %23 = tpu.matmul %21, %22, %cst_14 {dimension_numbers = #tpu.dot_dimension_numbers<[1], [0], [0], [1], [0, 0, 1, 1], [], []>} : vector<16x256xbf16>, vector<256x128xbf16>, vector<16x128xf32> -> vector<16x128xf32>
    %c0_15 = arith.constant 0 : index
    %c0_16 = arith.constant 0 : index
    %24 = vector.load %arg9[%c0_15, %c0_16] : memref<1x128xf32, #tpu.memory_space<vmem>>, vector<1x128xf32>
    %25 = vector.broadcast %24 : vector<1x128xf32> to vector<16x128xf32>
    %26 = arith.addf %23, %25 : vector<16x128xf32>
    %c0_17 = arith.constant 0 : index
    %c0_18 = arith.constant 0 : index
    %27 = vector.load %arg3[%c0_17, %c0_18] : memref<1x128xf32, #tpu.memory_space<vmem>>, vector<1x128xf32>
    %28 = vector.broadcast %27 : vector<1x128xf32> to vector<16x128xf32>
    %29 = arith.mulf %26, %28 : vector<16x128xf32>
    %c0_19 = arith.constant 0 : index
    %c0_20 = arith.constant 0 : index
    %30 = vector.load %arg2[%c0_19, %c0_20] : memref<1x128xf32, #tpu.memory_space<vmem>>, vector<1x128xf32>
    %31 = vector.broadcast %30 : vector<1x128xf32> to vector<16x128xf32>
    %32 = arith.addf %29, %31 : vector<16x128xf32>
    %c0_21 = arith.constant 0 : index
    %c0_22 = arith.constant 0 : index
    %33 = vector.load %arg10[%c0_21, %c0_22] : memref<128x384xbf16, #tpu.memory_space<vmem>>, vector<128x384xbf16>
    %cst_23 = arith.constant dense<0.000000e+00> : vector<16x384xf32>
    %34 = tpu.matmul %1, %33, %cst_23 {dimension_numbers = #tpu.dot_dimension_numbers<[1], [0], [0], [1], [0, 0, 1, 1], [], []>} : vector<16x128xbf16>, vector<128x384xbf16>, vector<16x384xf32> -> vector<16x384xf32>
    %c0_24 = arith.constant 0 : index
    %c0_25 = arith.constant 0 : index
    %35 = vector.load %arg12[%c0_24, %c0_25] : memref<1x384xf32, #tpu.memory_space<vmem>>, vector<1x384xf32>
    %36 = vector.broadcast %35 : vector<1x384xf32> to vector<16x384xf32>
    %37 = arith.addf %34, %36 : vector<16x384xf32>
    %c0_26 = arith.constant 0 : index
    %c0_27 = arith.constant 0 : index
    %38 = vector.load %arg11[%c0_26, %c0_27] : memref<128x384xbf16, #tpu.memory_space<vmem>>, vector<128x384xbf16>
    %cst_28 = arith.constant dense<0.000000e+00> : vector<16x384xf32>
    %39 = tpu.matmul %2, %38, %cst_28 {dimension_numbers = #tpu.dot_dimension_numbers<[1], [0], [0], [1], [0, 0, 1, 1], [], []>} : vector<16x128xbf16>, vector<128x384xbf16>, vector<16x384xf32> -> vector<16x384xf32>
    %c0_29 = arith.constant 0 : index
    %c0_30 = arith.constant 0 : index
    %40 = vector.load %arg13[%c0_29, %c0_30] : memref<1x384xf32, #tpu.memory_space<vmem>>, vector<1x384xf32>
    %41 = vector.broadcast %40 : vector<1x384xf32> to vector<16x384xf32>
    %42 = arith.addf %39, %41 : vector<16x384xf32>
    %43 = vector.extract_strided_slice %37 {offsets = [0, 0], sizes = [16, 128], strides = [1, 1]} : vector<16x384xf32> to vector<16x128xf32>
    %44 = vector.extract_strided_slice %42 {offsets = [0, 0], sizes = [16, 128], strides = [1, 1]} : vector<16x384xf32> to vector<16x128xf32>
    %45 = arith.addf %43, %44 : vector<16x128xf32>
    %cst_31 = arith.constant 5.000000e-01 : f32
    %46 = vector.broadcast %cst_31 : f32 to vector<16x128xf32>
    %47 = arith.mulf %46, %45 : vector<16x128xf32>
    %48 = math.tanh %47 : vector<16x128xf32>
    %cst_32 = arith.constant 5.000000e-01 : f32
    %49 = vector.broadcast %cst_32 : f32 to vector<16x128xf32>
    %50 = arith.mulf %49, %48 : vector<16x128xf32>
    %cst_33 = arith.constant 5.000000e-01 : f32
    %51 = vector.broadcast %cst_33 : f32 to vector<16x128xf32>
    %52 = arith.addf %50, %51 : vector<16x128xf32>
    %53 = vector.extract_strided_slice %37 {offsets = [0, 128], sizes = [16, 128], strides = [1, 1]} : vector<16x384xf32> to vector<16x128xf32>
    %54 = vector.extract_strided_slice %42 {offsets = [0, 128], sizes = [16, 128], strides = [1, 1]} : vector<16x384xf32> to vector<16x128xf32>
    %55 = arith.addf %53, %54 : vector<16x128xf32>
    %cst_34 = arith.constant 5.000000e-01 : f32
    %56 = vector.broadcast %cst_34 : f32 to vector<16x128xf32>
    %57 = arith.mulf %56, %55 : vector<16x128xf32>
    %58 = math.tanh %57 : vector<16x128xf32>
    %cst_35 = arith.constant 5.000000e-01 : f32
    %59 = vector.broadcast %cst_35 : f32 to vector<16x128xf32>
    %60 = arith.mulf %59, %58 : vector<16x128xf32>
    %cst_36 = arith.constant 5.000000e-01 : f32
    %61 = vector.broadcast %cst_36 : f32 to vector<16x128xf32>
    %62 = arith.addf %60, %61 : vector<16x128xf32>
    %63 = vector.extract_strided_slice %37 {offsets = [0, 256], sizes = [16, 128], strides = [1, 1]} : vector<16x384xf32> to vector<16x128xf32>
    %64 = vector.extract_strided_slice %42 {offsets = [0, 256], sizes = [16, 128], strides = [1, 1]} : vector<16x384xf32> to vector<16x128xf32>
    %65 = arith.mulf %52, %64 : vector<16x128xf32>
    %66 = arith.addf %63, %65 : vector<16x128xf32>
    %67 = math.tanh %66 : vector<16x128xf32>
    %cst_37 = arith.constant 1.000000e+00 : f32
    %68 = vector.broadcast %cst_37 : f32 to vector<16x128xf32>
    %69 = arith.subf %68, %62 : vector<16x128xf32>
    %70 = arith.mulf %69, %67 : vector<16x128xf32>
    %71 = arith.extf %2 : vector<16x128xbf16> to vector<16x128xf32>
    %72 = arith.mulf %62, %71 : vector<16x128xf32>
    %73 = arith.addf %70, %72 : vector<16x128xf32>
    %74 = arith.truncf %73 : vector<16x128xf32> to vector<16x128xbf16>
    %c0_38 = arith.constant 0 : index
    %c0_39 = arith.constant 0 : index
    %75 = vector.load %arg14[%c0_38, %c0_39] : memref<128x384xbf16, #tpu.memory_space<vmem>>, vector<128x384xbf16>
    %cst_40 = arith.constant dense<0.000000e+00> : vector<16x384xf32>
    %76 = tpu.matmul %74, %75, %cst_40 {dimension_numbers = #tpu.dot_dimension_numbers<[1], [0], [0], [1], [0, 0, 1, 1], [], []>} : vector<16x128xbf16>, vector<128x384xbf16>, vector<16x384xf32> -> vector<16x384xf32>
    %c0_41 = arith.constant 0 : index
    %c0_42 = arith.constant 0 : index
    %77 = vector.load %arg16[%c0_41, %c0_42] : memref<1x384xf32, #tpu.memory_space<vmem>>, vector<1x384xf32>
    %78 = vector.broadcast %77 : vector<1x384xf32> to vector<16x384xf32>
    %79 = arith.addf %76, %78 : vector<16x384xf32>
    %c0_43 = arith.constant 0 : index
    %c0_44 = arith.constant 0 : index
    %80 = vector.load %arg15[%c0_43, %c0_44] : memref<128x384xbf16, #tpu.memory_space<vmem>>, vector<128x384xbf16>
    %cst_45 = arith.constant dense<0.000000e+00> : vector<16x384xf32>
    %81 = tpu.matmul %3, %80, %cst_45 {dimension_numbers = #tpu.dot_dimension_numbers<[1], [0], [0], [1], [0, 0, 1, 1], [], []>} : vector<16x128xbf16>, vector<128x384xbf16>, vector<16x384xf32> -> vector<16x384xf32>
    %c0_46 = arith.constant 0 : index
    %c0_47 = arith.constant 0 : index
    %82 = vector.load %arg17[%c0_46, %c0_47] : memref<1x384xf32, #tpu.memory_space<vmem>>, vector<1x384xf32>
    %83 = vector.broadcast %82 : vector<1x384xf32> to vector<16x384xf32>
    %84 = arith.addf %81, %83 : vector<16x384xf32>
    %85 = vector.extract_strided_slice %79 {offsets = [0, 0], sizes = [16, 128], strides = [1, 1]} : vector<16x384xf32> to vector<16x128xf32>
    %86 = vector.extract_strided_slice %84 {offsets = [0, 0], sizes = [16, 128], strides = [1, 1]} : vector<16x384xf32> to vector<16x128xf32>
    %87 = arith.addf %85, %86 : vector<16x128xf32>
    %cst_48 = arith.constant 5.000000e-01 : f32
    %88 = vector.broadcast %cst_48 : f32 to vector<16x128xf32>
    %89 = arith.mulf %88, %87 : vector<16x128xf32>
    %90 = math.tanh %89 : vector<16x128xf32>
    %cst_49 = arith.constant 5.000000e-01 : f32
    %91 = vector.broadcast %cst_49 : f32 to vector<16x128xf32>
    %92 = arith.mulf %91, %90 : vector<16x128xf32>
    %cst_50 = arith.constant 5.000000e-01 : f32
    %93 = vector.broadcast %cst_50 : f32 to vector<16x128xf32>
    %94 = arith.addf %92, %93 : vector<16x128xf32>
    %95 = vector.extract_strided_slice %79 {offsets = [0, 128], sizes = [16, 128], strides = [1, 1]} : vector<16x384xf32> to vector<16x128xf32>
    %96 = vector.extract_strided_slice %84 {offsets = [0, 128], sizes = [16, 128], strides = [1, 1]} : vector<16x384xf32> to vector<16x128xf32>
    %97 = arith.addf %95, %96 : vector<16x128xf32>
    %cst_51 = arith.constant 5.000000e-01 : f32
    %98 = vector.broadcast %cst_51 : f32 to vector<16x128xf32>
    %99 = arith.mulf %98, %97 : vector<16x128xf32>
    %100 = math.tanh %99 : vector<16x128xf32>
    %cst_52 = arith.constant 5.000000e-01 : f32
    %101 = vector.broadcast %cst_52 : f32 to vector<16x128xf32>
    %102 = arith.mulf %101, %100 : vector<16x128xf32>
    %cst_53 = arith.constant 5.000000e-01 : f32
    %103 = vector.broadcast %cst_53 : f32 to vector<16x128xf32>
    %104 = arith.addf %102, %103 : vector<16x128xf32>
    %105 = vector.extract_strided_slice %79 {offsets = [0, 256], sizes = [16, 128], strides = [1, 1]} : vector<16x384xf32> to vector<16x128xf32>
    %106 = vector.extract_strided_slice %84 {offsets = [0, 256], sizes = [16, 128], strides = [1, 1]} : vector<16x384xf32> to vector<16x128xf32>
    %107 = arith.mulf %94, %106 : vector<16x128xf32>
    %108 = arith.addf %105, %107 : vector<16x128xf32>
    %109 = math.tanh %108 : vector<16x128xf32>
    %cst_54 = arith.constant 1.000000e+00 : f32
    %110 = vector.broadcast %cst_54 : f32 to vector<16x128xf32>
    %111 = arith.subf %110, %104 : vector<16x128xf32>
    %112 = arith.mulf %111, %109 : vector<16x128xf32>
    %113 = arith.extf %3 : vector<16x128xbf16> to vector<16x128xf32>
    %114 = arith.mulf %104, %113 : vector<16x128xf32>
    %115 = arith.addf %112, %114 : vector<16x128xf32>
    %116 = arith.mulf %115, %5 : vector<16x128xf32>
    %117 = arith.truncf %116 : vector<16x128xf32> to vector<16x128xbf16>
    %c0_55 = arith.constant 0 : index
    %c0_56 = arith.constant 0 : index
    %118 = vector.load %arg18[%c0_55, %c0_56] : memref<128x128xbf16, #tpu.memory_space<vmem>>, vector<128x128xbf16>
    %cst_57 = arith.constant dense<0.000000e+00> : vector<16x128xf32>
    %119 = tpu.matmul %117, %118, %cst_57 {dimension_numbers = #tpu.dot_dimension_numbers<[1], [0], [0], [1], [0, 0, 1, 1], [], []>} : vector<16x128xbf16>, vector<128x128xbf16>, vector<16x128xf32> -> vector<16x128xf32>
    %c0_58 = arith.constant 0 : index
    %c0_59 = arith.constant 0 : index
    %120 = vector.load %arg19[%c0_58, %c0_59] : memref<1x128xf32, #tpu.memory_space<vmem>>, vector<1x128xf32>
    %121 = vector.broadcast %120 : vector<1x128xf32> to vector<16x128xf32>
    %122 = arith.addf %119, %121 : vector<16x128xf32>
    %c0_60 = arith.constant 0 : index
    %c0_61 = arith.constant 0 : index
    %123 = vector.load %arg20[%c0_60, %c0_61] : memref<1x128xf32, #tpu.memory_space<vmem>>, vector<1x128xf32>
    %124 = vector.broadcast %123 : vector<1x128xf32> to vector<16x128xf32>
    %125 = arith.addf %122, %124 : vector<16x128xf32>
    %cst_62 = arith.constant 5.000000e-01 : f32
    %126 = vector.broadcast %cst_62 : f32 to vector<16x128xf32>
    %127 = arith.mulf %126, %125 : vector<16x128xf32>
    %128 = math.tanh %127 : vector<16x128xf32>
    %cst_63 = arith.constant 5.000000e-01 : f32
    %129 = vector.broadcast %cst_63 : f32 to vector<16x128xf32>
    %130 = arith.mulf %129, %128 : vector<16x128xf32>
    %cst_64 = arith.constant 5.000000e-01 : f32
    %131 = vector.broadcast %cst_64 : f32 to vector<16x128xf32>
    %132 = arith.addf %130, %131 : vector<16x128xf32>
    %c8_i32 = arith.constant 8 : i32
    %133 = tpu.dynamic_rotate %132 by %c8_i32 dim 1 : vector<16x128xf32>, i32 -> vector<16x128xf32>
    %c4_i32 = arith.constant 4 : i32
    %134 = tpu.dynamic_rotate %132 by %c4_i32 dim 1 : vector<16x128xf32>, i32 -> vector<16x128xf32>
    %135 = vector.broadcast %123 : vector<1x128xf32> to vector<16x128xf32>
    %136 = arith.mulf %133, %135 : vector<16x128xf32>
    %137 = arith.addf %122, %136 : vector<16x128xf32>
    %138 = math.tanh %137 : vector<16x128xf32>
    %cst_65 = arith.constant 1.000000e+00 : f32
    %139 = vector.broadcast %cst_65 : f32 to vector<16x128xf32>
    %140 = arith.subf %139, %134 : vector<16x128xf32>
    %141 = arith.mulf %140, %138 : vector<16x128xf32>
    %142 = arith.addf %141, %32 : vector<16x128xf32>
    %c0_66 = arith.constant 0 : index
    %c0_67 = arith.constant 0 : index
    %143 = vector.load %arg21[%c0_66, %c0_67] : memref<16x128xf32, #tpu.memory_space<vmem>>, vector<16x128xf32>
    tpu.vector_store %arg21[%c0_66, %c0_67], %142 {strides = array<i32>} : memref<16x128xf32, #tpu.memory_space<vmem>>, vector<16x128xf32>,
    return
  }
  func.func @transform_0(%arg0: i32) -> (i32, i32) {
    %c0_i32 = arith.constant 0 : i32
    %c0_i32_0 = arith.constant 0 : i32
    return %arg0, %c0_i32 : i32, i32
  }
  func.func @transform_1(%arg0: i32) -> (i32, i32) {
    %c0_i32 = arith.constant 0 : i32
    %c0_i32_0 = arith.constant 0 : i32
    %c0_i32_1 = arith.constant 0 : i32
    return %c0_i32, %c0_i32_0 : i32, i32
  }
  func.func @transform_2(%arg0: i32) -> (i32, i32) {
    %c0_i32 = arith.constant 0 : i32
    %c0_i32_0 = arith.constant 0 : i32
    %c0_i32_1 = arith.constant 0 : i32
    return %c0_i32, %c0_i32_0 : i32, i32
  }
  func.func @transform_3(%arg0: i32) -> (i32, i32) {
    %c0_i32 = arith.constant 0 : i32
    %c0_i32_0 = arith.constant 0 : i32
    %c0_i32_1 = arith.constant 0 : i32
    return %c0_i32, %c0_i32_0 : i32, i32
  }
  func.func @transform_4(%arg0: i32) -> (i32, i32) {
    %c0_i32 = arith.constant 0 : i32
    %c0_i32_0 = arith.constant 0 : i32
    %c0_i32_1 = arith.constant 0 : i32
    return %c0_i32, %c0_i32_0 : i32, i32
  }
  func.func @transform_5(%arg0: i32) -> (i32, i32) {
    %c0_i32 = arith.constant 0 : i32
    %c0_i32_0 = arith.constant 0 : i32
    %c0_i32_1 = arith.constant 0 : i32
    return %c0_i32, %c0_i32_0 : i32, i32
  }
  func.func @transform_6(%arg0: i32) -> (i32, i32) {
    %c0_i32 = arith.constant 0 : i32
    %c0_i32_0 = arith.constant 0 : i32
    %c0_i32_1 = arith.constant 0 : i32
    return %c0_i32, %c0_i32_0 : i32, i32
  }
  func.func @transform_7(%arg0: i32) -> (i32, i32) {
    %c0_i32 = arith.constant 0 : i32
    %c0_i32_0 = arith.constant 0 : i32
    %c0_i32_1 = arith.constant 0 : i32
    return %c0_i32, %c0_i32_0 : i32, i32
  }
  func.func @transform_8(%arg0: i32) -> (i32, i32) {
    %c0_i32 = arith.constant 0 : i32
    %c0_i32_0 = arith.constant 0 : i32
    %c0_i32_1 = arith.constant 0 : i32
    return %c0_i32, %c0_i32_0 : i32, i32
  }
  func.func @transform_9(%arg0: i32) -> (i32, i32) {
    %c0_i32 = arith.constant 0 : i32
    %c0_i32_0 = arith.constant 0 : i32
    %c0_i32_1 = arith.constant 0 : i32
    return %c0_i32, %c0_i32_0 : i32, i32
  }
  func.func @transform_10(%arg0: i32) -> (i32, i32) {
    %c0_i32 = arith.constant 0 : i32
    %c0_i32_0 = arith.constant 0 : i32
    %c0_i32_1 = arith.constant 0 : i32
    return %c0_i32, %c0_i32_0 : i32, i32
  }
  func.func @transform_11(%arg0: i32) -> (i32, i32) {
    %c0_i32 = arith.constant 0 : i32
    %c0_i32_0 = arith.constant 0 : i32
    %c0_i32_1 = arith.constant 0 : i32
    return %c0_i32, %c0_i32_0 : i32, i32
  }
  func.func @transform_12(%arg0: i32) -> (i32, i32) {
    %c0_i32 = arith.constant 0 : i32
    %c0_i32_0 = arith.constant 0 : i32
    %c0_i32_1 = arith.constant 0 : i32
    return %c0_i32, %c0_i32_0 : i32, i32
  }
  func.func @transform_13(%arg0: i32) -> (i32, i32) {
    %c0_i32 = arith.constant 0 : i32
    %c0_i32_0 = arith.constant 0 : i32
    %c0_i32_1 = arith.constant 0 : i32
    return %c0_i32, %c0_i32_0 : i32, i32
  }
  func.func @transform_14(%arg0: i32) -> (i32, i32) {
    %c0_i32 = arith.constant 0 : i32
    %c0_i32_0 = arith.constant 0 : i32
    %c0_i32_1 = arith.constant 0 : i32
    return %c0_i32, %c0_i32_0 : i32, i32
  }
  func.func @transform_15(%arg0: i32) -> (i32, i32) {
    %c0_i32 = arith.constant 0 : i32
    %c0_i32_0 = arith.constant 0 : i32
    %c0_i32_1 = arith.constant 0 : i32
    return %c0_i32, %c0_i32_0 : i32, i32
  }
  func.func @transform_16(%arg0: i32) -> (i32, i32) {
    %c0_i32 = arith.constant 0 : i32
    %c0_i32_0 = arith.constant 0 : i32
    %c0_i32_1 = arith.constant 0 : i32
    return %c0_i32, %c0_i32_0 : i32, i32
  }
  func.func @transform_17(%arg0: i32) -> (i32, i32) {
    %c0_i32 = arith.constant 0 : i32
    %c0_i32_0 = arith.constant 0 : i32
    %c0_i32_1 = arith.constant 0 : i32
    return %c0_i32, %c0_i32_0 : i32, i32
  }
  func.func @transform_18(%arg0: i32) -> (i32, i32) {
    %c0_i32 = arith.constant 0 : i32
    %c0_i32_0 = arith.constant 0 : i32
    %c0_i32_1 = arith.constant 0 : i32
    return %c0_i32, %c0_i32_0 : i32, i32
  }
  func.func @transform_19(%arg0: i32) -> (i32, i32) {
    %c0_i32 = arith.constant 0 : i32
    %c0_i32_0 = arith.constant 0 : i32
    %c0_i32_1 = arith.constant 0 : i32
    return %c0_i32, %c0_i32_0 : i32, i32
  }
  func.func @transform_20(%arg0: i32) -> (i32, i32) {
    %c0_i32 = arith.constant 0 : i32
    %c0_i32_0 = arith.constant 0 : i32
    return %arg0, %c0_i32 : i32, i32
  }
}

</mosaic_0001>

<llo_original>
// kernel: tpu_custom_call.1
$region0: #{tpu_custom_call.1}
  #allocation0 [shape = 'u32[]', space=smem, size = 0x4, offset = 0x4, fixed_abs, tag = 'smem constant byte address 0x4 - core index']
  #allocation1 [shape = 'u32[144,128]{1,0:T(1,128)}', space=vmem, size = 0x12000, scoped, tag = 'internal scratch']
  %s0 = inlined_call_operand.hbm [shape: bf16[16,512], index: 0, kind: input, shape index: {}]
  %s1 = inlined_call_operand.hbm [shape: f32[1,128], index: 1, kind: input, shape index: {}]
  %s2 = inlined_call_operand.hbm [shape: f32[1,128], index: 2, kind: input, shape index: {}]
  %s3 = inlined_call_operand.hbm [shape: bf16[128,256], index: 3, kind: input, shape index: {}]
  %s4 = inlined_call_operand.hbm [shape: f32[1,256], index: 4, kind: input, shape index: {}]
  %s5 = inlined_call_operand.hbm [shape: bf16[256,256], index: 5, kind: input, shape index: {}]
  %s6 = inlined_call_operand.hbm [shape: f32[1,256], index: 6, kind: input, shape index: {}]
  %s7 = inlined_call_operand.hbm [shape: bf16[256,128], index: 7, kind: input, shape index: {}]
  %s8 = inlined_call_operand.vmem [shape: f32[1,128], index: 8, kind: input, shape index: {}]
  %s9 = inlined_call_operand.hbm [shape: bf16[128,384], index: 9, kind: input, shape index: {}]
  %s10 = inlined_call_operand.hbm [shape: bf16[128,384], index: 10, kind: input, shape index: {}]
  %s11 = inlined_call_operand.vmem [shape: f32[1,384], index: 11, kind: input, shape index: {}]
  %s12 = inlined_call_operand.vmem [shape: f32[1,384], index: 12, kind: input, shape index: {}]
  %s13 = inlined_call_operand.hbm [shape: bf16[128,384], index: 13, kind: input, shape index: {}]
  %s14 = inlined_call_operand.hbm [shape: bf16[128,384], index: 14, kind: input, shape index: {}]
  %s15 = inlined_call_operand.vmem [shape: f32[1,384], index: 15, kind: input, shape index: {}]
  %s16 = inlined_call_operand.vmem [shape: f32[1,384], index: 16, kind: input, shape index: {}]
  %s17 = inlined_call_operand.hbm [shape: bf16[128,128], index: 17, kind: input, shape index: {}]
  %s18 = inlined_call_operand.vmem [shape: f32[1,128], index: 18, kind: input, shape index: {}]
  %s19 = inlined_call_operand.vmem [shape: f32[1,128], index: 19, kind: input, shape index: {}]
  %s20 = inlined_call_operand.hbm [shape: f32[16,128], index: 20, kind: output, shape index: {}]
  %s21 = sld [smem:[#allocation0]]
  $region142: #{tpu_custom_call.1} parent=0
    _
  %s23 = ssub.s32 1, %s21
  %s24 = scalar_select 0, %s23, %s21
  $region1: #{tpu_custom_call.1} parent=0
    #allocation2 [shape = 'u8[16384]{0}', space=vmem, size = 0x4000, scoped, tag = 'input window, operand 0, single buffered']
    #allocation3 [shape = 's32[1]{0}', space=sflag, size = 0x4, scoped, tag = 'scoped memory for tpu_custom_call.1']
    #allocation4 [shape = 's32[1]{0}', space=sflag, size = 0x4, scoped, tag = 'scoped memory for tpu_custom_call.1']
    #allocation5 [shape = 'u8[512]{0}', space=vmem, size = 0x400, scoped, tag = 'input window, operand 1, single buffered']
    #allocation6 [shape = 's32[1]{0}', space=sflag, size = 0x4, scoped, tag = 'scoped memory for tpu_custom_call.1']
    #allocation7 [shape = 'u8[512]{0}', space=vmem, size = 0x400, scoped, tag = 'input window, operand 2, single buffered']
    #allocation8 [shape = 'u8[65536]{0}', space=vmem, size = 0x10000, scoped, tag = 'input window, operand 3, single buffered']
    #allocation9 [shape = 's32[1]{0}', space=sflag, size = 0x4, scoped, tag = 'scoped memory for tpu_custom_call.1']
    #allocation10 [shape = 'u8[1024]{0}', space=vmem, size = 0x400, scoped, tag = 'input window, operand 4, single buffered']
    #allocation11 [shape = 'u8[131072]{0}', space=vmem, size = 0x20000, scoped, tag = 'input window, operand 5, single buffered']
    #allocation12 [shape = 's32[1]{0}', space=sflag, size = 0x4, scoped, tag = 'scoped memory for tpu_custom_call.1']
    #allocation13 [shape = 'u8[1024]{0}', space=vmem, size = 0x400, scoped, tag = 'input window, operand 6, single buffered']
    #allocation14 [shape = 'u8[65536]{0}', space=vmem, size = 0x10000, scoped, tag = 'input window, operand 7, single buffered']
    #allocation15 [shape = 's32[1]{0}', space=sflag, size = 0x4, scoped, tag = 'scoped memory for tpu_custom_call.1']
    #allocation16 [shape = 'u8[98304]{0}', space=vmem, size = 0x18000, scoped, tag = 'input window, operand 9, single buffered']
    #allocation17 [shape = 'u8[98304]{0}', space=vmem, size = 0x18000, scoped, tag = 'input window, operand 10, single buffered']
    #allocation18 [shape = 's32[1]{0}', space=sflag, size = 0x4, scoped, tag = 'scoped memory for tpu_custom_call.1']
    #allocation19 [shape = 'u8[98304]{0}', space=vmem, size = 0x18000, scoped, tag = 'input window, operand 13, single buffered']
    #allocation20 [shape = 'u8[98304]{0}', space=vmem, size = 0x18000, scoped, tag = 'input window, operand 14, single buffered']
    #allocation21 [shape = 's32[1]{0}', space=sflag, size = 0x4, scoped, tag = 'scoped memory for tpu_custom_call.1']
    #allocation22 [shape = 'u8[32768]{0}', space=vmem, size = 0x8000, scoped, tag = 'input window, operand 17, single buffered']
    #allocation23 [shape = 'u8[8192]{0}', space=vmem, size = 0x2000, scoped, tag = 'output window, operand 0, single buffered']
    %25 = vsyncpa [#allocation3], 0
    %26 = vsyncpa [#allocation6], 0
    %27 = vsyncpa [#allocation9], 0
    %28 = vsyncpa [#allocation12], 0
    %29 = vsyncpa [#allocation15], 0
    %30 = vsyncpa [#allocation18], 0
    %31 = vsyncpa [#allocation21], 0
    %32 = vsyncpa [#allocation4], 0
    // Predicated region
    $region2: #{tpu_custom_call.1} parent=1 // pred_check
      _
    $region3: #{tpu_custom_call.1} parent=1 // pred_check_branch
      %34 = sbr.rel (0) target = $region5
    $region4: #{tpu_custom_call.1} parent=1 // pred_region
      %s36 = ssub.s32 512, 512
      %37 = vsyncadd [#allocation3], %s36
      %s38 = sshll.u32 [#allocation2], 4
      %s39 = int_to_ptr.vmem [resolvable:$true] %s38
      %44 = dma.hbm_to_vmem [thread:$0]  %s0, 512, %s39, [#allocation3], 256, 256, 16
    $region5: #{tpu_custom_call.1} parent=1 // pred_fallthru
      _
    // Predicated region
    $region6: #{tpu_custom_call.1} parent=1 // pred_check
      _
    $region7: #{tpu_custom_call.1} parent=1 // pred_check_branch
      %46 = sbr.rel (0) target = $region9
    $region8: #{tpu_custom_call.1} parent=1 // pred_region
      %s48 = ssub.s32 16, 16
      %49 = vsyncadd [#allocation6], %s48
      %s51 = sshll.u32 [#allocation5], 4
      %s52 = int_to_ptr.vmem [resolvable:$true] %s51
      %54 = dma.hbm_to_vmem [thread:$0]  %s1, 16, %s52, [#allocation6]
    $region9: #{tpu_custom_call.1} parent=1 // pred_fallthru
      _
    // Predicated region
    $region10: #{tpu_custom_call.1} parent=1 // pred_check
      _
    $region11: #{tpu_custom_call.1} parent=1 // pred_check_branch
      %56 = sbr.rel (0) target = $region13
    $region12: #{tpu_custom_call.1} parent=1 // pred_region
      %s58 = ssub.s32 16, 16
      %59 = vsyncadd [#allocation6], %s58
      %s61 = sshll.u32 [#allocation7], 4
      %s62 = int_to_ptr.vmem [resolvable:$true] %s61
      %64 = dma.hbm_to_vmem [thread:$0]  %s2, 16, %s62, [#allocation6]
    $region13: #{tpu_custom_call.1} parent=1 // pred_fallthru
      _
    // Predicated region
    $region14: #{tpu_custom_call.1} parent=1 // pred_check
      _
    $region15: #{tpu_custom_call.1} parent=1 // pred_check_branch
      %66 = sbr.rel (0) target = $region17
    $region16: #{tpu_custom_call.1} parent=1 // pred_region
      %s68 = ssub.s32 2048, 2048
      %69 = vsyncadd [#allocation9], %s68
      %s70 = sshll.u32 [#allocation8], 4
      %s71 = int_to_ptr.vmem [resolvable:$true] %s70
      %76 = dma.hbm_to_vmem [thread:$0]  %s3, 2048, %s71, [#allocation9], 128, 128, 8
    $region17: #{tpu_custom_call.1} parent=1 // pred_fallthru
      _
    // Predicated region
    $region18: #{tpu_custom_call.1} parent=1 // pred_check
      _
    $region19: #{tpu_custom_call.1} parent=1 // pred_check_branch
      %78 = sbr.rel (0) target = $region21
    $region20: #{tpu_custom_call.1} parent=1 // pred_region
      %s80 = ssub.s32 32, 32
      %81 = vsyncadd [#allocation9], %s80
      %s83 = sshll.u32 [#allocation10], 4
      %s84 = int_to_ptr.vmem [resolvable:$true] %s83
      %86 = dma.hbm_to_vmem [thread:$0]  %s4, 32, %s84, [#allocation9]
    $region21: #{tpu_custom_call.1} parent=1 // pred_fallthru
      _
    // Predicated region
    $region22: #{tpu_custom_call.1} parent=1 // pred_check
      _
    $region23: #{tpu_custom_call.1} parent=1 // pred_check_branch
      %88 = sbr.rel (0) target = $region25
    $region24: #{tpu_custom_call.1} parent=1 // pred_region
      %s90 = ssub.s32 4096, 4096
      %91 = vsyncadd [#allocation12], %s90
      %s92 = sshll.u32 [#allocation11], 4
      %s93 = int_to_ptr.vmem [resolvable:$true] %s92
      %98 = dma.hbm_to_vmem [thread:$0]  %s5, 4096, %s93, [#allocation12], 128, 128, 8
    $region25: #{tpu_custom_call.1} parent=1 // pred_fallthru
      _
    // Predicated region
    $region26: #{tpu_custom_call.1} parent=1 // pred_check
      _
    $region27: #{tpu_custom_call.1} parent=1 // pred_check_branch
      %100 = sbr.rel (0) target = $region29
    $region28: #{tpu_custom_call.1} parent=1 // pred_region
      %s102 = ssub.s32 32, 32
      %103 = vsyncadd [#allocation12], %s102
      %s105 = sshll.u32 [#allocation13], 4
      %s106 = int_to_ptr.vmem [resolvable:$true] %s105
      %108 = dma.hbm_to_vmem [thread:$0]  %s6, 32, %s106, [#allocation12]
    $region29: #{tpu_custom_call.1} parent=1 // pred_fallthru
      _
    // Predicated region
    $region30: #{tpu_custom_call.1} parent=1 // pred_check
      _
    $region31: #{tpu_custom_call.1} parent=1 // pred_check_branch
      %110 = sbr.rel (0) target = $region33
    $region32: #{tpu_custom_call.1} parent=1 // pred_region
      %s112 = ssub.s32 2048, 2048
      %113 = vsyncadd [#allocation15], %s112
      %s114 = sshll.u32 [#allocation14], 4
      %s115 = int_to_ptr.vmem [resolvable:$true] %s114
      %120 = dma.hbm_to_vmem [thread:$0]  %s7, 2048, %s115, [#allocation15], 64, 64, 4
    $region33: #{tpu_custom_call.1} parent=1 // pred_fallthru
      _
    // Predicated region
    $region34: #{tpu_custom_call.1} parent=1 // pred_check
      _
    $region35: #{tpu_custom_call.1} parent=1 // pred_check_branch
      %122 = sbr.rel (0) target = $region37
    $region36: #{tpu_custom_call.1} parent=1 // pred_region
      _
    $region37: #{tpu_custom_call.1} parent=1 // pred_fallthru
      _
    // Predicated region
    $region38: #{tpu_custom_call.1} parent=1 // pred_check
      _
    $region39: #{tpu_custom_call.1} parent=1 // pred_check_branch
      %124 = sbr.rel (0) target = $region41
    $region40: #{tpu_custom_call.1} parent=1 // pred_region
      %s126 = ssub.s32 3072, 3072
      %127 = vsyncadd [#allocation15], %s126
      %s128 = sshll.u32 [#allocation16], 4
      %s129 = int_to_ptr.vmem [resolvable:$true] %s128
      %134 = dma.hbm_to_vmem [thread:$0]  %s9, 3072, %s129, [#allocation15], 192, 192, 12
    $region41: #{tpu_custom_call.1} parent=1 // pred_fallthru
      _
    // Predicated region
    $region42: #{tpu_custom_call.1} parent=1 // pred_check
      _
    $region43: #{tpu_custom_call.1} parent=1 // pred_check_branch
      %136 = sbr.rel (0) target = $region45
    $region44: #{tpu_custom_call.1} parent=1 // pred_region
      %s138 = ssub.s32 3072, 3072
      %139 = vsyncadd [#allocation18], %s138
      %s140 = sshll.u32 [#allocation17], 4
      %s141 = int_to_ptr.vmem [resolvable:$true] %s140
      %146 = dma.hbm_to_vmem [thread:$0]  %s10, 3072, %s141, [#allocation18], 192, 192, 12
    $region45: #{tpu_custom_call.1} parent=1 // pred_fallthru
      _
    // Predicated region
    $region46: #{tpu_custom_call.1} parent=1 // pred_check
      _
    $region47: #{tpu_custom_call.1} parent=1 // pred_check_branch
      %148 = sbr.rel (0) target = $region49
    $region48: #{tpu_custom_call.1} parent=1 // pred_region
      _
    $region49: #{tpu_custom_call.1} parent=1 // pred_fallthru
      _
    // Predicated region
    $region50: #{tpu_custom_call.1} parent=1 // pred_check
      _
    $region51: #{tpu_custom_call.1} parent=1 // pred_check_branch
      %150 = sbr.rel (0) target = $region53
    $region52: #{tpu_custom_call.1} parent=1 // pred_region
      _
    $region53: #{tpu_custom_call.1} parent=1 // pred_fallthru
      _
    // Predicated region
    $region54: #{tpu_custom_call.1} parent=1 // pred_check
      _
    $region55: #{tpu_custom_call.1} parent=1 // pred_check_branch
      %152 = sbr.rel (0) target = $region57
    $region56: #{tpu_custom_call.1} parent=1 // pred_region
      %s154 = ssub.s32 3072, 3072
      %155 = vsyncadd [#allocation18], %s154
      %s156 = sshll.u32 [#allocation19], 4
      %s157 = int_to_ptr.vmem [resolvable:$true] %s156
      %162 = dma.hbm_to_vmem [thread:$0]  %s13, 3072, %s157, [#allocation18], 192, 192, 12
    $region57: #{tpu_custom_call.1} parent=1 // pred_fallthru
      _
    // Predicated region
    $region58: #{tpu_custom_call.1} parent=1 // pred_check
      _
    $region59: #{tpu_custom_call.1} parent=1 // pred_check_branch
      %164 = sbr.rel (0) target = $region61
    $region60: #{tpu_custom_call.1} parent=1 // pred_region
      %s166 = ssub.s32 3072, 3072
      %167 = vsyncadd [#allocation21], %s166
      %s168 = sshll.u32 [#allocation20], 4
      %s169 = int_to_ptr.vmem [resolvable:$true] %s168
      %174 = dma.hbm_to_vmem [thread:$0]  %s14, 3072, %s169, [#allocation21], 192, 192, 12
    $region61: #{tpu_custom_call.1} parent=1 // pred_fallthru
      _
    // Predicated region
    $region62: #{tpu_custom_call.1} parent=1 // pred_check
      _
    $region63: #{tpu_custom_call.1} parent=1 // pred_check_branch
      %176 = sbr.rel (0) target = $region65
    $region64: #{tpu_custom_call.1} parent=1 // pred_region
      _
    $region65: #{tpu_custom_call.1} parent=1 // pred_fallthru
      _
    // Predicated region
    $region66: #{tpu_custom_call.1} parent=1 // pred_check
      _
    $region67: #{tpu_custom_call.1} parent=1 // pred_check_branch
      %178 = sbr.rel (0) target = $region69
    $region68: #{tpu_custom_call.1} parent=1 // pred_region
      _
    $region69: #{tpu_custom_call.1} parent=1 // pred_fallthru
      _
    // Predicated region
    $region70: #{tpu_custom_call.1} parent=1 // pred_check
      _
    $region71: #{tpu_custom_call.1} parent=1 // pred_check_branch
      %180 = sbr.rel (0) target = $region73
    $region72: #{tpu_custom_call.1} parent=1 // pred_region
      %s182 = ssub.s32 1024, 1024
      %183 = vsyncadd [#allocation21], %s182
      %s184 = sshll.u32 [#allocation22], 4
      %s185 = int_to_ptr.vmem [resolvable:$true] %s184
      %190 = dma.hbm_to_vmem [thread:$0]  %s17, 1024, %s185, [#allocation21], 64, 64, 4
    $region73: #{tpu_custom_call.1} parent=1 // pred_fallthru
      _
    // Predicated region
    $region74: #{tpu_custom_call.1} parent=1 // pred_check
      _
    $region75: #{tpu_custom_call.1} parent=1 // pred_check_branch
      %192 = sbr.rel (0) target = $region77
    $region76: #{tpu_custom_call.1} parent=1 // pred_region
      _
    $region77: #{tpu_custom_call.1} parent=1 // pred_fallthru
      _
    // Predicated region
    $region78: #{tpu_custom_call.1} parent=1 // pred_check
      _
    $region79: #{tpu_custom_call.1} parent=1 // pred_check_branch
      %194 = sbr.rel (0) target = $region81
    $region80: #{tpu_custom_call.1} parent=1 // pred_region
      _
    $region81: #{tpu_custom_call.1} parent=1 // pred_fallthru
      _
    // Predicated region
    $region82: #{tpu_custom_call.1} parent=1 // pred_check
      _
    $region83: #{tpu_custom_call.1} parent=1 // pred_check_branch
      %196 = sbr.rel (0) target = $region85
    $region84: #{tpu_custom_call.1} parent=1 // pred_region
      %197 = dma.done [#allocation3], 512
    $region85: #{tpu_custom_call.1} parent=1 // pred_fallthru
      _
    // Predicated region
    $region86: #{tpu_custom_call.1} parent=1 // pred_check
      _
    $region87: #{tpu_custom_call.1} parent=1 // pred_check_branch
      %199 = sbr.rel (0) target = $region89
    $region88: #{tpu_custom_call.1} parent=1 // pred_region
      %200 = dma.done [#allocation6], 16
    $region89: #{tpu_custom_call.1} parent=1 // pred_fallthru
      _
    // Predicated region
    $region90: #{tpu_custom_call.1} parent=1 // pred_check
      _
    $region91: #{tpu_custom_call.1} parent=1 // pred_check_branch
      %202 = sbr.rel (0) target = $region93
    $region92: #{tpu_custom_call.1} parent=1 // pred_region
      %203 = dma.done [#allocation6], 16
    $region93: #{tpu_custom_call.1} parent=1 // pred_fallthru
      _
    // Predicated region
    $region94: #{tpu_custom_call.1} parent=1 // pred_check
      _
    $region95: #{tpu_custom_call.1} parent=1 // pred_check_branch
      %205 = sbr.rel (0) target = $region97
    $region96: #{tpu_custom_call.1} parent=1 // pred_region
      %206 = dma.done [#allocation9], 2048
    $region97: #{tpu_custom_call.1} parent=1 // pred_fallthru
      _
    // Predicated region
    $region98: #{tpu_custom_call.1} parent=1 // pred_check
      _
    $region99: #{tpu_custom_call.1} parent=1 // pred_check_branch
      %208 = sbr.rel (0) target = $region101
    $region100: #{tpu_custom_call.1} parent=1 // pred_region
      %209 = dma.done [#allocation9], 32
    $region101: #{tpu_custom_call.1} parent=1 // pred_fallthru
      _
    // Predicated region
    $region102: #{tpu_custom_call.1} parent=1 // pred_check
      _
    $region103: #{tpu_custom_call.1} parent=1 // pred_check_branch
      %211 = sbr.rel (0) target = $region105
    $region104: #{tpu_custom_call.1} parent=1 // pred_region
      %212 = dma.done [#allocation12], 4096
    $region105: #{tpu_custom_call.1} parent=1 // pred_fallthru
      _
    // Predicated region
    $region106: #{tpu_custom_call.1} parent=1 // pred_check
      _
    $region107: #{tpu_custom_call.1} parent=1 // pred_check_branch
      %214 = sbr.rel (0) target = $region109
    $region108: #{tpu_custom_call.1} parent=1 // pred_region
      %215 = dma.done [#allocation12], 32
    $region109: #{tpu_custom_call.1} parent=1 // pred_fallthru
      _
    // Predicated region
    $region110: #{tpu_custom_call.1} parent=1 // pred_check
      _
    $region111: #{tpu_custom_call.1} parent=1 // pred_check_branch
      %217 = sbr.rel (0) target = $region113
    $region112: #{tpu_custom_call.1} parent=1 // pred_region
      %218 = dma.done [#allocation15], 2048
    $region113: #{tpu_custom_call.1} parent=1 // pred_fallthru
      _
    // Predicated region
    $region114: #{tpu_custom_call.1} parent=1 // pred_check
      _
    $region115: #{tpu_custom_call.1} parent=1 // pred_check_branch
      %220 = sbr.rel (0) target = $region117
    $region116: #{tpu_custom_call.1} parent=1 // pred_region
      %221 = dma.done [#allocation15], 3072
    $region117: #{tpu_custom_call.1} parent=1 // pred_fallthru
      _
    // Predicated region
    $region118: #{tpu_custom_call.1} parent=1 // pred_check
      _
    $region119: #{tpu_custom_call.1} parent=1 // pred_check_branch
      %223 = sbr.rel (0) target = $region121
    $region120: #{tpu_custom_call.1} parent=1 // pred_region
      %224 = dma.done [#allocation18], 3072
    $region121: #{tpu_custom_call.1} parent=1 // pred_fallthru
      _
    // Predicated region
    $region122: #{tpu_custom_call.1} parent=1 // pred_check
      _
    $region123: #{tpu_custom_call.1} parent=1 // pred_check_branch
      %226 = sbr.rel (0) target = $region125
    $region124: #{tpu_custom_call.1} parent=1 // pred_region
      %227 = dma.done [#allocation18], 3072
    $region125: #{tpu_custom_call.1} parent=1 // pred_fallthru
      _
    // Predicated region
    $region126: #{tpu_custom_call.1} parent=1 // pred_check
      _
    $region127: #{tpu_custom_call.1} parent=1 // pred_check_branch
      %229 = sbr.rel (0) target = $region129
    $region128: #{tpu_custom_call.1} parent=1 // pred_region
      %230 = dma.done [#allocation21], 3072
    $region129: #{tpu_custom_call.1} parent=1 // pred_fallthru
      _
    // Predicated region
    $region130: #{tpu_custom_call.1} parent=1 // pred_check
      _
    $region131: #{tpu_custom_call.1} parent=1 // pred_check_branch
      %232 = sbr.rel (0) target = $region133
    $region132: #{tpu_custom_call.1} parent=1 // pred_region
      %233 = dma.done [#allocation21], 1024
    $region133: #{tpu_custom_call.1} parent=1 // pred_fallthru
      _
    %v235 = vld [vmem:[#allocation2] sm:$0xff]
    %v236 = vld [vmem:[#allocation2 + $0x8] sm:$0xff]
    %v237 = vld [vmem:[#allocation2 + $0x10] sm:$0xff]
    %v238 = vld [vmem:[#allocation2 + $0x18] sm:$0xff]
    %v241 = vrot.slane %v236, 4
    %v242 = vrot.slane %v238, 4
    %v245 = vunpack.c.l.bf16 %v241
    %v246 = vunpack.c.l.bf16 %v242
    %v247 = vld [vmem:[#allocation8] sm:$0xff]
    %v248 = vld [vmem:[#allocation8 + $0x8] sm:$0xff]
    %v249 = vld [vmem:[#allocation8 + $0x10] sm:$0xff]
    %v250 = vld [vmem:[#allocation8 + $0x18] sm:$0xff]
    %v251 = vld [vmem:[#allocation8 + $0x20] sm:$0xff]
    %v252 = vld [vmem:[#allocation8 + $0x28] sm:$0xff]
    %v253 = vld [vmem:[#allocation8 + $0x30] sm:$0xff]
    %v254 = vld [vmem:[#allocation8 + $0x38] sm:$0xff]
    %v255 = vld [vmem:[#allocation8 + $0x40] sm:$0xff]
    %v256 = vld [vmem:[#allocation8 + $0x48] sm:$0xff]
    %v257 = vld [vmem:[#allocation8 + $0x50] sm:$0xff]
    %v258 = vld [vmem:[#allocation8 + $0x58] sm:$0xff]
    %v259 = vld [vmem:[#allocation8 + $0x60] sm:$0xff]
    %v260 = vld [vmem:[#allocation8 + $0x68] sm:$0xff]
    %v261 = vld [vmem:[#allocation8 + $0x70] sm:$0xff]
    %v262 = vld [vmem:[#allocation8 + $0x78] sm:$0xff]
    %v263 = vld [vmem:[#allocation10] sm:$0x3]
    %v265 = vlaneseq
    %v266 = vshrl.u32 %v265, 7
    %v267 = vsub.s32 0, %v266
    %v268 = vrot.slane %v263, %v267
    %v269 = vlaneseq
    %v270 = vshrl.u32 %v269, 7
    %v271 = vsub.s32 1, %v270
    %v272 = vrot.slane %v263, %v271
    %v277 = vunpack.c.l.b16 %v235
    %v278 = vunpack.c.l.b16 %v237
    %v279 = vpack.c.b16 %v278, %v277
    %v297 = vunpack.c.l.b16 %v247
    %v298 = vunpack.c.h.b16 %v247
    %v299 = vunpack.c.l.b16 %v248
    %v300 = vunpack.c.h.b16 %v248
    %v301 = vunpack.c.l.b16 %v249
    %v302 = vunpack.c.h.b16 %v249
    %v303 = vunpack.c.l.b16 %v250
    %v304 = vunpack.c.h.b16 %v250
    %v305 = vunpack.c.l.b16 %v251
    %v306 = vunpack.c.h.b16 %v251
    %v307 = vunpack.c.l.b16 %v252
    %v308 = vunpack.c.h.b16 %v252
    %v309 = vunpack.c.l.b16 %v253
    %v310 = vunpack.c.h.b16 %v253
    %v311 = vunpack.c.l.b16 %v254
    %v312 = vunpack.c.h.b16 %v254
    %v313 = vunpack.c.l.b16 %v255
    %v314 = vunpack.c.h.b16 %v255
    %v315 = vunpack.c.l.b16 %v256
    %v316 = vunpack.c.h.b16 %v256
    %v317 = vunpack.c.l.b16 %v257
    %v318 = vunpack.c.h.b16 %v257
    %v319 = vunpack.c.l.b16 %v258
    %v320 = vunpack.c.h.b16 %v258
    %v321 = vunpack.c.l.b16 %v259
    %v322 = vunpack.c.h.b16 %v259
    %v323 = vunpack.c.l.b16 %v260
    %v324 = vunpack.c.h.b16 %v260
    %v325 = vunpack.c.l.b16 %v261
    %v326 = vunpack.c.h.b16 %v261
    %v327 = vunpack.c.l.b16 %v262
    %v328 = vunpack.c.h.b16 %v262
    %v329 = vpack.c.b16 %v299, %v297
    %v330 = vpack.c.b16 %v300, %v298
    %v331 = vpack.c.b16 %v303, %v301
    %v332 = vpack.c.b16 %v304, %v302
    %v333 = vpack.c.b16 %v307, %v305
    %v334 = vpack.c.b16 %v308, %v306
    %v335 = vpack.c.b16 %v311, %v309
    %v336 = vpack.c.b16 %v312, %v310
    %v337 = vpack.c.b16 %v315, %v313
    %v338 = vpack.c.b16 %v316, %v314
    %v339 = vpack.c.b16 %v319, %v317
    %v340 = vpack.c.b16 %v320, %v318
    %v341 = vpack.c.b16 %v323, %v321
    %v342 = vpack.c.b16 %v324, %v322
    %v343 = vpack.c.b16 %v327, %v325
    %v344 = vpack.c.b16 %v328, %v326
    %361 = vmatprep.subr.bf16.mxu0 %v344
    %362 = vmatpush1.bf16.msra.mxu0 %v343
    %363 = vmatprep.subr.bf16.mxu0 %v342
    %364 = vmatpush1.bf16.msra.mxu0 %v341
    %365 = vmatprep.subr.bf16.mxu0 %v340
    %366 = vmatpush1.bf16.msra.mxu0 %v339
    %367 = vmatprep.subr.bf16.mxu0 %v338
    %368 = vmatpush1.bf16.msra.mxu0 %v337
    %369 = vmatprep.subr.bf16.mxu0 %v336
    %370 = vmatpush1.bf16.msra.mxu0 %v335
    %371 = vmatprep.subr.bf16.mxu0 %v334
    %372 = vmatpush1.bf16.msra.mxu0 %v333
    %373 = vmatprep.subr.bf16.mxu0 %v332
    %374 = vmatpush1.bf16.msra.mxu0 %v331
    %375 = vmatprep.subr.bf16.mxu0 %v330
    %376 = vmatpush1.bf16.msra.mxu0 %v329
    %377 = vmatprep.subr.bf16.mxu0 0
    %378 = vmatpush2.bf16.msra.mxu0 0
    %379 = vmatprep.subr.bf16.mxu0 0
    %380 = vmatpush2.bf16.msra.mxu0 0
    %381 = vmatprep.subr.bf16.mxu0 0
    %382 = vmatpush2.bf16.msra.mxu0 0
    %383 = vmatprep.subr.bf16.mxu0 0
    %384 = vmatpush2.bf16.msra.mxu0 0
    %385 = vmatprep.subr.bf16.mxu0 0
    %386 = vmatpush2.bf16.msra.mxu0 0
    %387 = vmatprep.subr.bf16.mxu0 0
    %388 = vmatpush2.bf16.msra.mxu0 0
    %389 = vmatprep.subr.bf16.mxu0 0
    %390 = vmatpush2.bf16.msra.mxu0 0
    %391 = vmatprep.subr.bf16.mxu0 0
    %392 = vmatpush2.bf16.msra.mxu0 0
    %393 = vmatprep.mubr.bf16.mxu0 0
    %394 = vmatmul.mubr.bf16.gmra.mxu0 %v279
    %v395 = vpop.f32.mrf.mxu0
    %v396 = vadd.f32 %v268, %v395
    %v397 = vpop.f32.mrf.mxu0
    %v398 = vadd.f32 %v272, %v397
    %v399 = vpop.f32.mrf.mxu0
    %v400 = vadd.f32 %v268, %v399
    %v401 = vpop.f32.mrf.mxu0
    %v402 = vadd.f32 %v272, %v401
    %403 = vdwg.mxu0
    %v404 = vmax.f32 %v396, 0.0
    %v405 = vmax.f32 %v398, 0.0
    %v406 = vmax.f32 %v400, 0.0
    %v407 = vmax.f32 %v402, 0.0
    %v408 = vpack.c.bf16 %v406, %v404
    %v409 = vpack.c.bf16 %v407, %v405
    %v410 = vld [vmem:[#allocation11] sm:$0xff]
    %v411 = vld [vmem:[#allocation11 + $0x8] sm:$0xff]
    %v412 = vld [vmem:[#allocation11 + $0x10] sm:$0xff]
    %v413 = vld [vmem:[#allocation11 + $0x18] sm:$0xff]
    %v414 = vld [vmem:[#allocation11 + $0x20] sm:$0xff]
    %v415 = vld [vmem:[#allocation11 + $0x28] sm:$0xff]
    %v416 = vld [vmem:[#allocation11 + $0x30] sm:$0xff]
    %v417 = vld [vmem:[#allocation11 + $0x38] sm:$0xff]
    %v418 = vld [vmem:[#allocation11 + $0x40] sm:$0xff]
    %v419 = vld [vmem:[#allocation11 + $0x48] sm:$0xff]
    %v420 = vld [vmem:[#allocation11 + $0x50] sm:$0xff]
    %v421 = vld [vmem:[#allocation11 + $0x58] sm:$0xff]
    %v422 = vld [vmem:[#allocation11 + $0x60] sm:$0xff]
    %v423 = vld [vmem:[#allocation11 + $0x68] sm:$0xff]
    %v424 = vld [vmem:[#allocation11 + $0x70] sm:$0xff]
    %v425 = vld [vmem:[#allocation11 + $0x78] sm:$0xff]
    %v426 = vld [vmem:[#allocation11 + $0x80] sm:$0xff]
    %v427 = vld [vmem:[#allocation11 + $0x88] sm:$0xff]
    %v428 = vld [vmem:[#allocation11 + $0x90] sm:$0xff]
    %v429 = vld [vmem:[#allocation11 + $0x98] sm:$0xff]
    %v430 = vld [vmem:[#allocation11 + $0xa0] sm:$0xff]
    %v431 = vld [vmem:[#allocation11 + $0xa8] sm:$0xff]
    %v432 = vld [vmem:[#allocation11 + $0xb0] sm:$0xff]
    %v433 = vld [vmem:[#allocation11 + $0xb8] sm:$0xff]
    %v434 = vld [vmem:[#allocation11 + $0xc0] sm:$0xff]
    %v435 = vld [vmem:[#allocation11 + $0xc8] sm:$0xff]
    %v436 = vld [vmem:[#allocation11 + $0xd0] sm:$0xff]
    %v437 = vld [vmem:[#allocation11 + $0xd8] sm:$0xff]
    %v438 = vld [vmem:[#allocation11 + $0xe0] sm:$0xff]
    %v439 = vld [vmem:[#allocation11 + $0xe8] sm:$0xff]
    %v440 = vld [vmem:[#allocation11 + $0xf0] sm:$0xff]
    %v441 = vld [vmem:[#allocation11 + $0xf8] sm:$0xff]
    %v442 = vld [vmem:[#allocation13] sm:$0x3]
    %v444 = vlaneseq
    %v445 = vshrl.u32 %v444, 7
    %v446 = vsub.s32 0, %v445
    %v447 = vrot.slane %v442, %v446
    %v448 = vlaneseq
    %v449 = vshrl.u32 %v448, 7
    %v450 = vsub.s32 1, %v449
    %v451 = vrot.slane %v442, %v450
    %v486 = vunpack.c.l.b16 %v410
    %v487 = vunpack.c.h.b16 %v410
    %v488 = vunpack.c.l.b16 %v411
    %v489 = vunpack.c.h.b16 %v411
    %v490 = vunpack.c.l.b16 %v412
    %v491 = vunpack.c.h.b16 %v412
    %v492 = vunpack.c.l.b16 %v413
    %v493 = vunpack.c.h.b16 %v413
    %v494 = vunpack.c.l.b16 %v414
    %v495 = vunpack.c.h.b16 %v414
    %v496 = vunpack.c.l.b16 %v415
    %v497 = vunpack.c.h.b16 %v415
    %v498 = vunpack.c.l.b16 %v416
    %v499 = vunpack.c.h.b16 %v416
    %v500 = vunpack.c.l.b16 %v417
    %v501 = vunpack.c.h.b16 %v417
    %v502 = vunpack.c.l.b16 %v418
    %v503 = vunpack.c.h.b16 %v418
    %v504 = vunpack.c.l.b16 %v419
    %v505 = vunpack.c.h.b16 %v419
    %v506 = vunpack.c.l.b16 %v420
    %v507 = vunpack.c.h.b16 %v420
    %v508 = vunpack.c.l.b16 %v421
    %v509 = vunpack.c.h.b16 %v421
    %v510 = vunpack.c.l.b16 %v422
    %v511 = vunpack.c.h.b16 %v422
    %v512 = vunpack.c.l.b16 %v423
    %v513 = vunpack.c.h.b16 %v423
    %v514 = vunpack.c.l.b16 %v424
    %v515 = vunpack.c.h.b16 %v424
    %v516 = vunpack.c.l.b16 %v425
    %v517 = vunpack.c.h.b16 %v425
    %v518 = vunpack.c.l.b16 %v426
    %v519 = vunpack.c.h.b16 %v426
    %v520 = vunpack.c.l.b16 %v427
    %v521 = vunpack.c.h.b16 %v427
    %v522 = vunpack.c.l.b16 %v428
    %v523 = vunpack.c.h.b16 %v428
    %v524 = vunpack.c.l.b16 %v429
    %v525 = vunpack.c.h.b16 %v429
    %v526 = vunpack.c.l.b16 %v430
    %v527 = vunpack.c.h.b16 %v430
    %v528 = vunpack.c.l.b16 %v431
    %v529 = vunpack.c.h.b16 %v431
    %v530 = vunpack.c.l.b16 %v432
    %v531 = vunpack.c.h.b16 %v432
    %v532 = vunpack.c.l.b16 %v433
    %v533 = vunpack.c.h.b16 %v433
    %v534 = vunpack.c.l.b16 %v434
    %v535 = vunpack.c.h.b16 %v434
    %v536 = vunpack.c.l.b16 %v435
    %v537 = vunpack.c.h.b16 %v435
    %v538 = vunpack.c.l.b16 %v436
    %v539 = vunpack.c.h.b16 %v436
    %v540 = vunpack.c.l.b16 %v437
    %v541 = vunpack.c.h.b16 %v437
    %v542 = vunpack.c.l.b16 %v438
    %v543 = vunpack.c.h.b16 %v438
    %v544 = vunpack.c.l.b16 %v439
    %v545 = vunpack.c.h.b16 %v439
    %v546 = vunpack.c.l.b16 %v440
    %v547 = vunpack.c.h.b16 %v440
    %v548 = vunpack.c.l.b16 %v441
    %v549 = vunpack.c.h.b16 %v441
    %v550 = vpack.c.b16 %v488, %v486
    %v551 = vpack.c.b16 %v489, %v487
    %v552 = vpack.c.b16 %v492, %v490
    %v553 = vpack.c.b16 %v493, %v491
    %v554 = vpack.c.b16 %v496, %v494
    %v555 = vpack.c.b16 %v497, %v495
    %v556 = vpack.c.b16 %v500, %v498
    %v557 = vpack.c.b16 %v501, %v499
    %v558 = vpack.c.b16 %v504, %v502
    %v559 = vpack.c.b16 %v505, %v503
    %v560 = vpack.c.b16 %v508, %v506
    %v561 = vpack.c.b16 %v509, %v507
    %v562 = vpack.c.b16 %v512, %v510
    %v563 = vpack.c.b16 %v513, %v511
    %v564 = vpack.c.b16 %v516, %v514
    %v565 = vpack.c.b16 %v517, %v515
    %v566 = vpack.c.b16 %v520, %v518
    %v567 = vpack.c.b16 %v521, %v519
    %v568 = vpack.c.b16 %v524, %v522
    %v569 = vpack.c.b16 %v525, %v523
    %v570 = vpack.c.b16 %v528, %v526
    %v571 = vpack.c.b16 %v529, %v527
    %v572 = vpack.c.b16 %v532, %v530
    %v573 = vpack.c.b16 %v533, %v531
    %v574 = vpack.c.b16 %v536, %v534
    %v575 = vpack.c.b16 %v537, %v535
    %v576 = vpack.c.b16 %v540, %v538
    %v577 = vpack.c.b16 %v541, %v539
    %v578 = vpack.c.b16 %v544, %v542
    %v579 = vpack.c.b16 %v545, %v543
    %v580 = vpack.c.b16 %v548, %v546
    %v581 = vpack.c.b16 %v549, %v547
    %614 = vmatprep.subr.bf16.mxu0 %v565
    %615 = vmatpush1.bf16.msra.mxu0 %v564
    %616 = vmatprep.subr.bf16.mxu0 %v563
    %617 = vmatpush1.bf16.msra.mxu0 %v562
    %618 = vmatprep.subr.bf16.mxu0 %v561
    %619 = vmatpush1.bf16.msra.mxu0 %v560
    %620 = vmatprep.subr.bf16.mxu0 %v559
    %621 = vmatpush1.bf16.msra.mxu0 %v558
    %622 = vmatprep.subr.bf16.mxu0 %v557
    %623 = vmatpush1.bf16.msra.mxu0 %v556
    %624 = vmatprep.subr.bf16.mxu0 %v555
    %625 = vmatpush1.bf16.msra.mxu0 %v554
    %626 = vmatprep.subr.bf16.mxu0 %v553
    %627 = vmatpush1.bf16.msra.mxu0 %v552
    %628 = vmatprep.subr.bf16.mxu0 %v551
    %629 = vmatpush1.bf16.msra.mxu0 %v550
    %630 = vmatprep.subr.bf16.mxu0 %v581
    %631 = vmatpush2.bf16.msra.mxu0 %v580
    %632 = vmatprep.subr.bf16.mxu0 %v579
    %633 = vmatpush2.bf16.msra.mxu0 %v578
    %634 = vmatprep.subr.bf16.mxu0 %v577
    %635 = vmatpush2.bf16.msra.mxu0 %v576
    %636 = vmatprep.subr.bf16.mxu0 %v575
    %637 = vmatpush2.bf16.msra.mxu0 %v574
    %638 = vmatprep.subr.bf16.mxu0 %v573
    %639 = vmatpush2.bf16.msra.mxu0 %v572
    %640 = vmatprep.subr.bf16.mxu0 %v571
    %641 = vmatpush2.bf16.msra.mxu0 %v570
    %642 = vmatprep.subr.bf16.mxu0 %v569
    %643 = vmatpush2.bf16.msra.mxu0 %v568
    %644 = vmatprep.subr.bf16.mxu0 %v567
    %645 = vmatpush2.bf16.msra.mxu0 %v566
    %646 = vmatprep.mubr.bf16.mxu0 %v409
    %647 = vmatmul.mubr.bf16.gmra.mxu0 %v408
    %v648 = vpop.f32.mrf.mxu0
    %v649 = vadd.f32 %v447, %v648
    %v650 = vpop.f32.mrf.mxu0
    %v651 = vadd.f32 %v451, %v650
    %v652 = vpop.f32.mrf.mxu0
    %v653 = vadd.f32 %v447, %v652
    %v654 = vpop.f32.mrf.mxu0
    %v655 = vadd.f32 %v451, %v654
    %656 = vdwg.mxu0
    %v657 = vmax.f32 %v649, 0.0
    %v658 = vmax.f32 %v651, 0.0
    %v659 = vmax.f32 %v653, 0.0
    %v660 = vmax.f32 %v655, 0.0
    %v661 = vpack.c.bf16 %v659, %v657
    %v662 = vpack.c.bf16 %v660, %v658
    %v663 = vld [vmem:[#allocation14] sm:$0xf]
    %v664 = vld [vmem:[#allocation14 + $0x4] sm:$0xf]
    %v665 = vld [vmem:[#allocation14 + $0x8] sm:$0xf]
    %v666 = vld [vmem:[#allocation14 + $0xc] sm:$0xf]
    %v667 = vld [vmem:[#allocation14 + $0x10] sm:$0xf]
    %v668 = vld [vmem:[#allocation14 + $0x14] sm:$0xf]
    %v669 = vld [vmem:[#allocation14 + $0x18] sm:$0xf]
    %v670 = vld [vmem:[#allocation14 + $0x1c] sm:$0xf]
    %v671 = vld [vmem:[#allocation14 + $0x20] sm:$0xf]
    %v672 = vld [vmem:[#allocation14 + $0x24] sm:$0xf]
    %v673 = vld [vmem:[#allocation14 + $0x28] sm:$0xf]
    %v674 = vld [vmem:[#allocation14 + $0x2c] sm:$0xf]
    %v675 = vld [vmem:[#allocation14 + $0x30] sm:$0xf]
    %v676 = vld [vmem:[#allocation14 + $0x34] sm:$0xf]
    %v677 = vld [vmem:[#allocation14 + $0x38] sm:$0xf]
    %v678 = vld [vmem:[#allocation14 + $0x3c] sm:$0xf]
    %v679 = vld [vmem:[#allocation14 + $0x40] sm:$0xf]
    %v680 = vld [vmem:[#allocation14 + $0x44] sm:$0xf]
    %v681 = vld [vmem:[#allocation14 + $0x48] sm:$0xf]
    %v682 = vld [vmem:[#allocation14 + $0x4c] sm:$0xf]
    %v683 = vld [vmem:[#allocation14 + $0x50] sm:$0xf]
    %v684 = vld [vmem:[#allocation14 + $0x54] sm:$0xf]
    %v685 = vld [vmem:[#allocation14 + $0x58] sm:$0xf]
    %v686 = vld [vmem:[#allocation14 + $0x5c] sm:$0xf]
    %v687 = vld [vmem:[#allocation14 + $0x60] sm:$0xf]
    %v688 = vld [vmem:[#allocation14 + $0x64] sm:$0xf]
    %v689 = vld [vmem:[#allocation14 + $0x68] sm:$0xf]
    %v690 = vld [vmem:[#allocation14 + $0x6c] sm:$0xf]
    %v691 = vld [vmem:[#allocation14 + $0x70] sm:$0xf]
    %v692 = vld [vmem:[#allocation14 + $0x74] sm:$0xf]
    %v693 = vld [vmem:[#allocation14 + $0x78] sm:$0xf]
    %v694 = vld [vmem:[#allocation14 + $0x7c] sm:$0xf]
    %v695 = vld [vmem:[%s8] sm:$0x1]
    %v697 = vlaneseq
    %v698 = vshrl.u32 %v697, 7
    %v699 = vsub.s32 0, %v698
    %v700 = vrot.slane %v695, %v699
    %v734 = vunpack.c.l.b16 %v663
    %v735 = vunpack.c.l.b16 %v664
    %v736 = vunpack.c.l.b16 %v665
    %v737 = vunpack.c.l.b16 %v666
    %v738 = vunpack.c.l.b16 %v667
    %v739 = vunpack.c.l.b16 %v668
    %v740 = vunpack.c.l.b16 %v669
    %v741 = vunpack.c.l.b16 %v670
    %v742 = vunpack.c.l.b16 %v671
    %v743 = vunpack.c.l.b16 %v672
    %v744 = vunpack.c.l.b16 %v673
    %v745 = vunpack.c.l.b16 %v674
    %v746 = vunpack.c.l.b16 %v675
    %v747 = vunpack.c.l.b16 %v676
    %v748 = vunpack.c.l.b16 %v677
    %v749 = vunpack.c.l.b16 %v678
    %v750 = vunpack.c.l.b16 %v679
    %v751 = vunpack.c.l.b16 %v680
    %v752 = vunpack.c.l.b16 %v681
    %v753 = vunpack.c.l.b16 %v682
    %v754 = vunpack.c.l.b16 %v683
    %v755 = vunpack.c.l.b16 %v684
    %v756 = vunpack.c.l.b16 %v685
    %v757 = vunpack.c.l.b16 %v686
    %v758 = vunpack.c.l.b16 %v687
    %v759 = vunpack.c.l.b16 %v688
    %v760 = vunpack.c.l.b16 %v689
    %v761 = vunpack.c.l.b16 %v690
    %v762 = vunpack.c.l.b16 %v691
    %v763 = vunpack.c.l.b16 %v692
    %v764 = vunpack.c.l.b16 %v693
    %v765 = vunpack.c.l.b16 %v694
    %v766 = vpack.c.b16 %v735, %v734
    %v767 = vpack.c.b16 %v737, %v736
    %v768 = vpack.c.b16 %v739, %v738
    %v769 = vpack.c.b16 %v741, %v740
    %v770 = vpack.c.b16 %v743, %v742
    %v771 = vpack.c.b16 %v745, %v744
    %v772 = vpack.c.b16 %v747, %v746
    %v773 = vpack.c.b16 %v749, %v748
    %v774 = vpack.c.b16 %v751, %v750
    %v775 = vpack.c.b16 %v753, %v752
    %v776 = vpack.c.b16 %v755, %v754
    %v777 = vpack.c.b16 %v757, %v756
    %v778 = vpack.c.b16 %v759, %v758
    %v779 = vpack.c.b16 %v761, %v760
    %v780 = vpack.c.b16 %v763, %v762
    %v781 = vpack.c.b16 %v765, %v764
    %798 = vmatprep.subr.bf16.mxu0 0
    %799 = vmatpush1.bf16.msra.mxu0 %v773
    %800 = vmatprep.subr.bf16.mxu0 0
    %801 = vmatpush1.bf16.msra.mxu0 %v772
    %802 = vmatprep.subr.bf16.mxu0 0
    %803 = vmatpush1.bf16.msra.mxu0 %v771
    %804 = vmatprep.subr.bf16.mxu0 0
    %805 = vmatpush1.bf16.msra.mxu0 %v770
    %806 = vmatprep.subr.bf16.mxu0 0
    %807 = vmatpush1.bf16.msra.mxu0 %v769
    %808 = vmatprep.subr.bf16.mxu0 0
    %809 = vmatpush1.bf16.msra.mxu0 %v768
    %810 = vmatprep.subr.bf16.mxu0 0
    %811 = vmatpush1.bf16.msra.mxu0 %v767
    %812 = vmatprep.subr.bf16.mxu0 0
    %813 = vmatpush1.bf16.msra.mxu0 %v766
    %814 = vmatprep.subr.bf16.mxu0 0
    %815 = vmatpush2.bf16.msra.mxu0 %v781
    %816 = vmatprep.subr.bf16.mxu0 0
    %817 = vmatpush2.bf16.msra.mxu0 %v780
    %818 = vmatprep.subr.bf16.mxu0 0
    %819 = vmatpush2.bf16.msra.mxu0 %v779
    %820 = vmatprep.subr.bf16.mxu0 0
    %821 = vmatpush2.bf16.msra.mxu0 %v778
    %822 = vmatprep.subr.bf16.mxu0 0
    %823 = vmatpush2.bf16.msra.mxu0 %v777
    %824 = vmatprep.subr.bf16.mxu0 0
    %825 = vmatpush2.bf16.msra.mxu0 %v776
    %826 = vmatprep.subr.bf16.mxu0 0
    %827 = vmatpush2.bf16.msra.mxu0 %v775
    %828 = vmatprep.subr.bf16.mxu0 0
    %829 = vmatpush2.bf16.msra.mxu0 %v774
    %830 = vmatprep.mubr.bf16.mxu0 %v662
    %831 = vmatmul.mubr.bf16.gmra.mxu0 %v661
    %v832 = vpop.f32.mrf.mxu0
    %v833 = vadd.f32 %v700, %v832
    %v834 = vpop.f32.mrf.mxu0
    %v835 = vpop.f32.mrf.mxu0
    %v836 = vadd.f32 %v700, %v835
    %v837 = vpop.f32.mrf.mxu0
    %838 = vdwg.mxu0
    %v839 = vld [vmem:[#allocation7] sm:$0x1]
    %v841 = vlaneseq
    %v842 = vshrl.u32 %v841, 7
    %v843 = vsub.s32 0, %v842
    %v844 = vrot.slane %v839, %v843
    %v846 = vmul.f32 %v833, %v844
    %v847 = vmul.f32 %v836, %v844
    %v848 = vld [vmem:[#allocation5] sm:$0x1]
    %v850 = vlaneseq
    %v851 = vshrl.u32 %v850, 7
    %v852 = vsub.s32 0, %v851
    %v853 = vrot.slane %v848, %v852
    %v855 = vadd.f32 %v846, %v853
    %v856 = vadd.f32 %v847, %v853
    %v857 = vld [vmem:[#allocation16] sm:$0xff]
    %v858 = vld [vmem:[#allocation16 + $0x8] sm:$0xf]
    %v859 = vld [vmem:[#allocation16 + $0xc] sm:$0xff]
    %v860 = vld [vmem:[#allocation16 + $0x14] sm:$0xf]
    %v861 = vld [vmem:[#allocation16 + $0x18] sm:$0xff]
    %v862 = vld [vmem:[#allocation16 + $0x20] sm:$0xf]
    %v863 = vld [vmem:[#allocation16 + $0x24] sm:$0xff]
    %v864 = vld [vmem:[#allocation16 + $0x2c] sm:$0xf]
    %v865 = vld [vmem:[#allocation16 + $0x30] sm:$0xff]
    %v866 = vld [vmem:[#allocation16 + $0x38] sm:$0xf]
    %v867 = vld [vmem:[#allocation16 + $0x3c] sm:$0xff]
    %v868 = vld [vmem:[#allocation16 + $0x44] sm:$0xf]
    %v869 = vld [vmem:[#allocation16 + $0x48] sm:$0xff]
    %v870 = vld [vmem:[#allocation16 + $0x50] sm:$0xf]
    %v871 = vld [vmem:[#allocation16 + $0x54] sm:$0xff]
    %v872 = vld [vmem:[#allocation16 + $0x5c] sm:$0xf]
    %v873 = vld [vmem:[#allocation16 + $0x60] sm:$0xff]
    %v874 = vld [vmem:[#allocation16 + $0x68] sm:$0xf]
    %v875 = vld [vmem:[#allocation16 + $0x6c] sm:$0xff]
    %v876 = vld [vmem:[#allocation16 + $0x74] sm:$0xf]
    %v877 = vld [vmem:[#allocation16 + $0x78] sm:$0xff]
    %v878 = vld [vmem:[#allocation16 + $0x80] sm:$0xf]
    %v879 = vld [vmem:[#allocation16 + $0x84] sm:$0xff]
    %v880 = vld [vmem:[#allocation16 + $0x8c] sm:$0xf]
    %v881 = vld [vmem:[#allocation16 + $0x90] sm:$0xff]
    %v882 = vld [vmem:[#allocation16 + $0x98] sm:$0xf]
    %v883 = vld [vmem:[#allocation16 + $0x9c] sm:$0xff]
    %v884 = vld [vmem:[#allocation16 + $0xa4] sm:$0xf]
    %v885 = vld [vmem:[#allocation16 + $0xa8] sm:$0xff]
    %v886 = vld [vmem:[#allocation16 + $0xb0] sm:$0xf]
    %v887 = vld [vmem:[#allocation16 + $0xb4] sm:$0xff]
    %v888 = vld [vmem:[#allocation16 + $0xbc] sm:$0xf]
    %v889 = vld [vmem:[%s11] sm:$0x7]
    %v891 = vlaneseq
    %v892 = vshrl.u32 %v891, 7
    %v893 = vsub.s32 0, %v892
    %v894 = vrot.slane %v889, %v893
    %v895 = vlaneseq
    %v896 = vshrl.u32 %v895, 7
    %v897 = vsub.s32 1, %v896
    %v898 = vrot.slane %v889, %v897
    %v899 = vlaneseq
    %v900 = vshrl.u32 %v899, 7
    %v901 = vsub.s32 2, %v900
    %v902 = vrot.slane %v889, %v901
    %v938 = vunpack.c.l.b16 %v857
    %v939 = vunpack.c.h.b16 %v857
    %v940 = vunpack.c.l.b16 %v858
    %v941 = vunpack.c.l.b16 %v859
    %v942 = vunpack.c.h.b16 %v859
    %v943 = vunpack.c.l.b16 %v860
    %v944 = vunpack.c.l.b16 %v861
    %v945 = vunpack.c.h.b16 %v861
    %v946 = vunpack.c.l.b16 %v862
    %v947 = vunpack.c.l.b16 %v863
    %v948 = vunpack.c.h.b16 %v863
    %v949 = vunpack.c.l.b16 %v864
    %v950 = vunpack.c.l.b16 %v865
    %v951 = vunpack.c.h.b16 %v865
    %v952 = vunpack.c.l.b16 %v866
    %v953 = vunpack.c.l.b16 %v867
    %v954 = vunpack.c.h.b16 %v867
    %v955 = vunpack.c.l.b16 %v868
    %v956 = vunpack.c.l.b16 %v869
    %v957 = vunpack.c.h.b16 %v869
    %v958 = vunpack.c.l.b16 %v870
    %v959 = vunpack.c.l.b16 %v871
    %v960 = vunpack.c.h.b16 %v871
    %v961 = vunpack.c.l.b16 %v872
    %v962 = vunpack.c.l.b16 %v873
    %v963 = vunpack.c.h.b16 %v873
    %v964 = vunpack.c.l.b16 %v874
    %v965 = vunpack.c.l.b16 %v875
    %v966 = vunpack.c.h.b16 %v875
    %v967 = vunpack.c.l.b16 %v876
    %v968 = vunpack.c.l.b16 %v877
    %v969 = vunpack.c.h.b16 %v877
    %v970 = vunpack.c.l.b16 %v878
    %v971 = vunpack.c.l.b16 %v879
    %v972 = vunpack.c.h.b16 %v879
    %v973 = vunpack.c.l.b16 %v880
    %v974 = vunpack.c.l.b16 %v881
    %v975 = vunpack.c.h.b16 %v881
    %v976 = vunpack.c.l.b16 %v882
    %v977 = vunpack.c.l.b16 %v883
    %v978 = vunpack.c.h.b16 %v883
    %v979 = vunpack.c.l.b16 %v884
    %v980 = vunpack.c.l.b16 %v885
    %v981 = vunpack.c.h.b16 %v885
    %v982 = vunpack.c.l.b16 %v886
    %v983 = vunpack.c.l.b16 %v887
    %v984 = vunpack.c.h.b16 %v887
    %v985 = vunpack.c.l.b16 %v888
    %v986 = vpack.c.b16 %v941, %v938
    %v987 = vpack.c.b16 %v942, %v939
    %v988 = vpack.c.b16 %v943, %v940
    %v989 = vpack.c.b16 %v947, %v944
    %v990 = vpack.c.b16 %v948, %v945
    %v991 = vpack.c.b16 %v949, %v946
    %v992 = vpack.c.b16 %v953, %v950
    %v993 = vpack.c.b16 %v954, %v951
    %v994 = vpack.c.b16 %v955, %v952
    %v995 = vpack.c.b16 %v959, %v956
    %v996 = vpack.c.b16 %v960, %v957
    %v997 = vpack.c.b16 %v961, %v958
    %v998 = vpack.c.b16 %v965, %v962
    %v999 = vpack.c.b16 %v966, %v963
    %v1000 = vpack.c.b16 %v967, %v964
    %v1001 = vpack.c.b16 %v971, %v968
    %v1002 = vpack.c.b16 %v972, %v969
    %v1003 = vpack.c.b16 %v973, %v970
    %v1004 = vpack.c.b16 %v977, %v974
    %v1005 = vpack.c.b16 %v978, %v975
    %v1006 = vpack.c.b16 %v979, %v976
    %v1007 = vpack.c.b16 %v983, %v980
    %v1008 = vpack.c.b16 %v984, %v981
    %v1009 = vpack.c.b16 %v985, %v982
    %1034 = vmatprep.subr.bf16.mxu0 %v1008
    %1035 = vmatpush1.bf16.msra.mxu0 %v1007
    %1036 = vmatprep.subr.bf16.mxu0 %v1005
    %1037 = vmatpush1.bf16.msra.mxu0 %v1004
    %1038 = vmatprep.subr.bf16.mxu0 %v1002
    %1039 = vmatpush1.bf16.msra.mxu0 %v1001
    %1040 = vmatprep.subr.bf16.mxu0 %v999
    %1041 = vmatpush1.bf16.msra.mxu0 %v998
    %1042 = vmatprep.subr.bf16.mxu0 %v996
    %1043 = vmatpush1.bf16.msra.mxu0 %v995
    %1044 = vmatprep.subr.bf16.mxu0 %v993
    %1045 = vmatpush1.bf16.msra.mxu0 %v992
    %1046 = vmatprep.subr.bf16.mxu0 %v990
    %1047 = vmatpush1.bf16.msra.mxu0 %v989
    %1048 = vmatprep.subr.bf16.mxu0 %v987
    %1049 = vmatpush1.bf16.msra.mxu0 %v986
    %1050 = vmatprep.subr.bf16.mxu0 0
    %1051 = vmatpush2.bf16.msra.mxu0 0
    %1052 = vmatprep.subr.bf16.mxu0 0
    %1053 = vmatpush2.bf16.msra.mxu0 0
    %1054 = vmatprep.subr.bf16.mxu0 0
    %1055 = vmatpush2.bf16.msra.mxu0 0
    %1056 = vmatprep.subr.bf16.mxu0 0
    %1057 = vmatpush2.bf16.msra.mxu0 0
    %1058 = vmatprep.subr.bf16.mxu0 0
    %1059 = vmatpush2.bf16.msra.mxu0 0
    %1060 = vmatprep.subr.bf16.mxu0 0
    %1061 = vmatpush2.bf16.msra.mxu0 0
    %1062 = vmatprep.subr.bf16.mxu0 0
    %1063 = vmatpush2.bf16.msra.mxu0 0
    %1064 = vmatprep.subr.bf16.mxu0 0
    %1065 = vmatpush2.bf16.msra.mxu0 0
    %1066 = vmatprep.mubr.bf16.mxu0 0
    %1067 = vmatmul.mubr.bf16.gmra.mxu0 %v279
    %v1068 = vpop.f32.mrf.mxu0
    %v1069 = vadd.f32 %v894, %v1068
    %v1070 = vpop.f32.mrf.mxu0
    %v1071 = vadd.f32 %v898, %v1070
    %v1072 = vpop.f32.mrf.mxu0
    %v1073 = vadd.f32 %v894, %v1072
    %v1074 = vpop.f32.mrf.mxu0
    %v1075 = vadd.f32 %v898, %v1074
    %1076 = vdwg.mxu0
    %1077 = vmatprep.subr.bf16.mxu0 0
    %1078 = vmatpush1.bf16.msra.mxu0 %v1009
    %1079 = vmatprep.subr.bf16.mxu0 0
    %1080 = vmatpush1.bf16.msra.mxu0 %v1006
    %1081 = vmatprep.subr.bf16.mxu0 0
    %1082 = vmatpush1.bf16.msra.mxu0 %v1003
    %1083 = vmatprep.subr.bf16.mxu0 0
    %1084 = vmatpush1.bf16.msra.mxu0 %v1000
    %1085 = vmatprep.subr.bf16.mxu0 0
    %1086 = vmatpush1.bf16.msra.mxu0 %v997
    %1087 = vmatprep.subr.bf16.mxu0 0
    %1088 = vmatpush1.bf16.msra.mxu0 %v994
    %1089 = vmatprep.subr.bf16.mxu0 0
    %1090 = vmatpush1.bf16.msra.mxu0 %v991
    %1091 = vmatprep.subr.bf16.mxu0 0
    %1092 = vmatpush1.bf16.msra.mxu0 %v988
    %1093 = vmatprep.subr.bf16.mxu0 0
    %1094 = vmatpush2.bf16.msra.mxu0 0
    %1095 = vmatprep.subr.bf16.mxu0 0
    %1096 = vmatpush2.bf16.msra.mxu0 0
    %1097 = vmatprep.subr.bf16.mxu0 0
    %1098 = vmatpush2.bf16.msra.mxu0 0
    %1099 = vmatprep.subr.bf16.mxu0 0
    %1100 = vmatpush2.bf16.msra.mxu0 0
    %1101 = vmatprep.subr.bf16.mxu0 0
    %1102 = vmatpush2.bf16.msra.mxu0 0
    %1103 = vmatprep.subr.bf16.mxu0 0
    %1104 = vmatpush2.bf16.msra.mxu0 0
    %1105 = vmatprep.subr.bf16.mxu0 0
    %1106 = vmatpush2.bf16.msra.mxu0 0
    %1107 = vmatprep.subr.bf16.mxu0 0
    %1108 = vmatpush2.bf16.msra.mxu0 0
    %1109 = vmatprep.mubr.bf16.mxu0 0
    %1110 = vmatmul.mubr.bf16.gmra.mxu0 %v279
    %v1111 = vpop.f32.mrf.mxu0
    %v1112 = vadd.f32 %v902, %v1111
    %v1113 = vpop.f32.mrf.mxu0
    %v1114 = vpop.f32.mrf.mxu0
    %v1115 = vadd.f32 %v902, %v1114
    %v1116 = vpop.f32.mrf.mxu0
    %1117 = vdwg.mxu0
    %v1118 = vld [vmem:[#allocation17] sm:$0xff]
    %v1119 = vld [vmem:[#allocation17 + $0x8] sm:$0xf]
    %v1120 = vld [vmem:[#allocation17 + $0xc] sm:$0xff]
    %v1121 = vld [vmem:[#allocation17 + $0x14] sm:$0xf]
    %v1122 = vld [vmem:[#allocation17 + $0x18] sm:$0xff]
    %v1123 = vld [vmem:[#allocation17 + $0x20] sm:$0xf]
    %v1124 = vld [vmem:[#allocation17 + $0x24] sm:$0xff]
    %v1125 = vld [vmem:[#allocation17 + $0x2c] sm:$0xf]
    %v1126 = vld [vmem:[#allocation17 + $0x30] sm:$0xff]
    %v1127 = vld [vmem:[#allocation17 + $0x38] sm:$0xf]
    %v1128 = vld [vmem:[#allocation17 + $0x3c] sm:$0xff]
    %v1129 = vld [vmem:[#allocation17 + $0x44] sm:$0xf]
    %v1130 = vld [vmem:[#allocation17 + $0x48] sm:$0xff]
    %v1131 = vld [vmem:[#allocation17 + $0x50] sm:$0xf]
    %v1132 = vld [vmem:[#allocation17 + $0x54] sm:$0xff]
    %v1133 = vld [vmem:[#allocation17 + $0x5c] sm:$0xf]
    %v1134 = vld [vmem:[#allocation17 + $0x60] sm:$0xff]
    %v1135 = vld [vmem:[#allocation17 + $0x68] sm:$0xf]
    %v1136 = vld [vmem:[#allocation17 + $0x6c] sm:$0xff]
    %v1137 = vld [vmem:[#allocation17 + $0x74] sm:$0xf]
    %v1138 = vld [vmem:[#allocation17 + $0x78] sm:$0xff]
    %v1139 = vld [vmem:[#allocation17 + $0x80] sm:$0xf]
    %v1140 = vld [vmem:[#allocation17 + $0x84] sm:$0xff]
    %v1141 = vld [vmem:[#allocation17 + $0x8c] sm:$0xf]
    %v1142 = vld [vmem:[#allocation17 + $0x90] sm:$0xff]
    %v1143 = vld [vmem:[#allocation17 + $0x98] sm:$0xf]
    %v1144 = vld [vmem:[#allocation17 + $0x9c] sm:$0xff]
    %v1145 = vld [vmem:[#allocation17 + $0xa4] sm:$0xf]
    %v1146 = vld [vmem:[#allocation17 + $0xa8] sm:$0xff]
    %v1147 = vld [vmem:[#allocation17 + $0xb0] sm:$0xf]
    %v1148 = vld [vmem:[#allocation17 + $0xb4] sm:$0xff]
    %v1149 = vld [vmem:[#allocation17 + $0xbc] sm:$0xf]
    %v1150 = vld [vmem:[%s12] sm:$0x7]
    %v1152 = vlaneseq
    %v1153 = vshrl.u32 %v1152, 7
    %v1154 = vsub.s32 0, %v1153
    %v1155 = vrot.slane %v1150, %v1154
    %v1156 = vlaneseq
    %v1157 = vshrl.u32 %v1156, 7
    %v1158 = vsub.s32 1, %v1157
    %v1159 = vrot.slane %v1150, %v1158
    %v1160 = vlaneseq
    %v1161 = vshrl.u32 %v1160, 7
    %v1162 = vsub.s32 2, %v1161
    %v1163 = vrot.slane %v1150, %v1162
    %v1167 = vunpack.c.h.b16 %v235
    %v1168 = vunpack.c.h.b16 %v237
    %v1169 = vpack.c.b16 %v1168, %v1167
    %v1203 = vunpack.c.l.b16 %v1118
    %v1204 = vunpack.c.h.b16 %v1118
    %v1205 = vunpack.c.l.b16 %v1119
    %v1206 = vunpack.c.l.b16 %v1120
    %v1207 = vunpack.c.h.b16 %v1120
    %v1208 = vunpack.c.l.b16 %v1121
    %v1209 = vunpack.c.l.b16 %v1122
    %v1210 = vunpack.c.h.b16 %v1122
    %v1211 = vunpack.c.l.b16 %v1123
    %v1212 = vunpack.c.l.b16 %v1124
    %v1213 = vunpack.c.h.b16 %v1124
    %v1214 = vunpack.c.l.b16 %v1125
    %v1215 = vunpack.c.l.b16 %v1126
    %v1216 = vunpack.c.h.b16 %v1126
    %v1217 = vunpack.c.l.b16 %v1127
    %v1218 = vunpack.c.l.b16 %v1128
    %v1219 = vunpack.c.h.b16 %v1128
    %v1220 = vunpack.c.l.b16 %v1129
    %v1221 = vunpack.c.l.b16 %v1130
    %v1222 = vunpack.c.h.b16 %v1130
    %v1223 = vunpack.c.l.b16 %v1131
    %v1224 = vunpack.c.l.b16 %v1132
    %v1225 = vunpack.c.h.b16 %v1132
    %v1226 = vunpack.c.l.b16 %v1133
    %v1227 = vunpack.c.l.b16 %v1134
    %v1228 = vunpack.c.h.b16 %v1134
    %v1229 = vunpack.c.l.b16 %v1135
    %v1230 = vunpack.c.l.b16 %v1136
    %v1231 = vunpack.c.h.b16 %v1136
    %v1232 = vunpack.c.l.b16 %v1137
    %v1233 = vunpack.c.l.b16 %v1138
    %v1234 = vunpack.c.h.b16 %v1138
    %v1235 = vunpack.c.l.b16 %v1139
    %v1236 = vunpack.c.l.b16 %v1140
    %v1237 = vunpack.c.h.b16 %v1140
    %v1238 = vunpack.c.l.b16 %v1141
    %v1239 = vunpack.c.l.b16 %v1142
    %v1240 = vunpack.c.h.b16 %v1142
    %v1241 = vunpack.c.l.b16 %v1143
    %v1242 = vunpack.c.l.b16 %v1144
    %v1243 = vunpack.c.h.b16 %v1144
    %v1244 = vunpack.c.l.b16 %v1145
    %v1245 = vunpack.c.l.b16 %v1146
    %v1246 = vunpack.c.h.b16 %v1146
    %v1247 = vunpack.c.l.b16 %v1147
    %v1248 = vunpack.c.l.b16 %v1148
    %v1249 = vunpack.c.h.b16 %v1148
    %v1250 = vunpack.c.l.b16 %v1149
    %v1251 = vpack.c.b16 %v1206, %v1203
    %v1252 = vpack.c.b16 %v1207, %v1204
    %v1253 = vpack.c.b16 %v1208, %v1205
    %v1254 = vpack.c.b16 %v1212, %v1209
    %v1255 = vpack.c.b16 %v1213, %v1210
    %v1256 = vpack.c.b16 %v1214, %v1211
    %v1257 = vpack.c.b16 %v1218, %v1215
    %v1258 = vpack.c.b16 %v1219, %v1216
    %v1259 = vpack.c.b16 %v1220, %v1217
    %v1260 = vpack.c.b16 %v1224, %v1221
    %v1261 = vpack.c.b16 %v1225, %v1222
    %v1262 = vpack.c.b16 %v1226, %v1223
    %v1263 = vpack.c.b16 %v1230, %v1227
    %v1264 = vpack.c.b16 %v1231, %v1228
    %v1265 = vpack.c.b16 %v1232, %v1229
    %v1266 = vpack.c.b16 %v1236, %v1233
    %v1267 = vpack.c.b16 %v1237, %v1234
    %v1268 = vpack.c.b16 %v1238, %v1235
    %v1269 = vpack.c.b16 %v1242, %v1239
    %v1270 = vpack.c.b16 %v1243, %v1240
    %v1271 = vpack.c.b16 %v1244, %v1241
    %v1272 = vpack.c.b16 %v1248, %v1245
    %v1273 = vpack.c.b16 %v1249, %v1246
    %v1274 = vpack.c.b16 %v1250, %v1247
    %1299 = vmatprep.subr.bf16.mxu0 %v1273
    %1300 = vmatpush1.bf16.msra.mxu0 %v1272
    %1301 = vmatprep.subr.bf16.mxu0 %v1270
    %1302 = vmatpush1.bf16.msra.mxu0 %v1269
    %1303 = vmatprep.subr.bf16.mxu0 %v1267
    %1304 = vmatpush1.bf16.msra.mxu0 %v1266
    %1305 = vmatprep.subr.bf16.mxu0 %v1264
    %1306 = vmatpush1.bf16.msra.mxu0 %v1263
    %1307 = vmatprep.subr.bf16.mxu0 %v1261
    %1308 = vmatpush1.bf16.msra.mxu0 %v1260
    %1309 = vmatprep.subr.bf16.mxu0 %v1258
    %1310 = vmatpush1.bf16.msra.mxu0 %v1257
    %1311 = vmatprep.subr.bf16.mxu0 %v1255
    %1312 = vmatpush1.bf16.msra.mxu0 %v1254
    %1313 = vmatprep.subr.bf16.mxu0 %v1252
    %1314 = vmatpush1.bf16.msra.mxu0 %v1251
    %1315 = vmatprep.subr.bf16.mxu0 0
    %1316 = vmatpush2.bf16.msra.mxu0 0
    %1317 = vmatprep.subr.bf16.mxu0 0
    %1318 = vmatpush2.bf16.msra.mxu0 0
    %1319 = vmatprep.subr.bf16.mxu0 0
    %1320 = vmatpush2.bf16.msra.mxu0 0
    %1321 = vmatprep.subr.bf16.mxu0 0
    %1322 = vmatpush2.bf16.msra.mxu0 0
    %1323 = vmatprep.subr.bf16.mxu0 0
    %1324 = vmatpush2.bf16.msra.mxu0 0
    %1325 = vmatprep.subr.bf16.mxu0 0
    %1326 = vmatpush2.bf16.msra.mxu0 0
    %1327 = vmatprep.subr.bf16.mxu0 0
    %1328 = vmatpush2.bf16.msra.mxu0 0
    %1329 = vmatprep.subr.bf16.mxu0 0
    %1330 = vmatpush2.bf16.msra.mxu0 0
    %1331 = vmatprep.mubr.bf16.mxu0 0
    %1332 = vmatmul.mubr.bf16.gmra.mxu0 %v1169
    %v1333 = vpop.f32.mrf.mxu0
    %v1334 = vadd.f32 %v1155, %v1333
    %v1335 = vpop.f32.mrf.mxu0
    %v1336 = vadd.f32 %v1159, %v1335
    %v1337 = vpop.f32.mrf.mxu0
    %v1338 = vadd.f32 %v1155, %v1337
    %v1339 = vpop.f32.mrf.mxu0
    %v1340 = vadd.f32 %v1159, %v1339
    %1341 = vdwg.mxu0
    %1342 = vmatprep.subr.bf16.mxu0 0
    %1343 = vmatpush1.bf16.msra.mxu0 %v1274
    %1344 = vmatprep.subr.bf16.mxu0 0
    %1345 = vmatpush1.bf16.msra.mxu0 %v1271
    %1346 = vmatprep.subr.bf16.mxu0 0
    %1347 = vmatpush1.bf16.msra.mxu0 %v1268
    %1348 = vmatprep.subr.bf16.mxu0 0
    %1349 = vmatpush1.bf16.msra.mxu0 %v1265
    %1350 = vmatprep.subr.bf16.mxu0 0
    %1351 = vmatpush1.bf16.msra.mxu0 %v1262
    %1352 = vmatprep.subr.bf16.mxu0 0
    %1353 = vmatpush1.bf16.msra.mxu0 %v1259
    %1354 = vmatprep.subr.bf16.mxu0 0
    %1355 = vmatpush1.bf16.msra.mxu0 %v1256
    %1356 = vmatprep.subr.bf16.mxu0 0
    %1357 = vmatpush1.bf16.msra.mxu0 %v1253
    %1358 = vmatprep.subr.bf16.mxu0 0
    %1359 = vmatpush2.bf16.msra.mxu0 0
    %1360 = vmatprep.subr.bf16.mxu0 0
    %1361 = vmatpush2.bf16.msra.mxu0 0
    %1362 = vmatprep.subr.bf16.mxu0 0
    %1363 = vmatpush2.bf16.msra.mxu0 0
    %1364 = vmatprep.subr.bf16.mxu0 0
    %1365 = vmatpush2.bf16.msra.mxu0 0
    %1366 = vmatprep.subr.bf16.mxu0 0
    %1367 = vmatpush2.bf16.msra.mxu0 0
    %1368 = vmatprep.subr.bf16.mxu0 0
    %1369 = vmatpush2.bf16.msra.mxu0 0
    %1370 = vmatprep.subr.bf16.mxu0 0
    %1371 = vmatpush2.bf16.msra.mxu0 0
    %1372 = vmatprep.subr.bf16.mxu0 0
    %1373 = vmatpush2.bf16.msra.mxu0 0
    %1374 = vmatprep.mubr.bf16.mxu0 0
    %1375 = vmatmul.mubr.bf16.gmra.mxu0 %v1169
    %v1376 = vpop.f32.mrf.mxu0
    %v1377 = vadd.f32 %v1163, %v1376
    %v1378 = vpop.f32.mrf.mxu0
    %v1379 = vpop.f32.mrf.mxu0
    %v1380 = vadd.f32 %v1163, %v1379
    %v1381 = vpop.f32.mrf.mxu0
    %1382 = vdwg.mxu0
    %v1383 = vadd.f32 %v1069, %v1334
    %v1384 = vadd.f32 %v1073, %v1338
    %v1385 = vmul.f32 %v1383, 0.5
    %v1386 = vmul.f32 %v1384, 0.5
    %v1387 = vtanh.pop %v1385
    %v1388 = vtanh.pop %v1386
    %v1389 = vmul.f32 %v1387, 0.5
    %v1390 = vmul.f32 %v1388, 0.5
    %v1391 = vadd.f32 %v1389, 0.5
    %v1392 = vadd.f32 %v1390, 0.5
    %v1393 = vadd.f32 %v1071, %v1336
    %v1394 = vadd.f32 %v1075, %v1340
    %v1395 = vmul.f32 %v1393, 0.5
    %v1396 = vmul.f32 %v1394, 0.5
    %v1397 = vtanh.pop %v1395
    %v1398 = vtanh.pop %v1396
    %v1399 = vmul.f32 %v1397, 0.5
    %v1400 = vmul.f32 %v1398, 0.5
    %v1401 = vadd.f32 %v1399, 0.5
    %v1402 = vadd.f32 %v1400, 0.5
    %v1403 = vmul.f32 %v1391, %v1377
    %v1404 = vmul.f32 %v1392, %v1380
    %v1405 = vadd.f32 %v1112, %v1403
    %v1406 = vadd.f32 %v1115, %v1404
    %v1407 = vtanh.pop %v1405
    %v1408 = vtanh.pop %v1406
    %v1409 = vsub.f32 1.0, %v1401
    %v1410 = vsub.f32 1.0, %v1402
    %v1411 = vmul.f32 %v1409, %v1407
    %v1412 = vmul.f32 %v1410, %v1408
    %v1413 = vrot.slane %v235, 4
    %v1414 = vrot.slane %v237, 4
    %v1417 = vunpack.c.l.bf16 %v1413
    %v1418 = vunpack.c.l.bf16 %v1414
    %v1419 = vmul.f32 %v1401, %v1417
    %v1420 = vmul.f32 %v1402, %v1418
    %v1421 = vadd.f32 %v1411, %v1419
    %v1422 = vadd.f32 %v1412, %v1420
    %v1423 = vpack.c.bf16 %v1422, %v1421
    %v1424 = vld [vmem:[#allocation19] sm:$0xff]
    %v1425 = vld [vmem:[#allocation19 + $0x8] sm:$0xf]
    %v1426 = vld [vmem:[#allocation19 + $0xc] sm:$0xff]
    %v1427 = vld [vmem:[#allocation19 + $0x14] sm:$0xf]
    %v1428 = vld [vmem:[#allocation19 + $0x18] sm:$0xff]
    %v1429 = vld [vmem:[#allocation19 + $0x20] sm:$0xf]
    %v1430 = vld [vmem:[#allocation19 + $0x24] sm:$0xff]
    %v1431 = vld [vmem:[#allocation19 + $0x2c] sm:$0xf]
    %v1432 = vld [vmem:[#allocation19 + $0x30] sm:$0xff]
    %v1433 = vld [vmem:[#allocation19 + $0x38] sm:$0xf]
    %v1434 = vld [vmem:[#allocation19 + $0x3c] sm:$0xff]
    %v1435 = vld [vmem:[#allocation19 + $0x44] sm:$0xf]
    %v1436 = vld [vmem:[#allocation19 + $0x48] sm:$0xff]
    %v1437 = vld [vmem:[#allocation19 + $0x50] sm:$0xf]
    %v1438 = vld [vmem:[#allocation19 + $0x54] sm:$0xff]
    %v1439 = vld [vmem:[#allocation19 + $0x5c] sm:$0xf]
    %v1440 = vld [vmem:[#allocation19 + $0x60] sm:$0xff]
    %v1441 = vld [vmem:[#allocation19 + $0x68] sm:$0xf]
    %v1442 = vld [vmem:[#allocation19 + $0x6c] sm:$0xff]
    %v1443 = vld [vmem:[#allocation19 + $0x74] sm:$0xf]
    %v1444 = vld [vmem:[#allocation19 + $0x78] sm:$0xff]
    %v1445 = vld [vmem:[#allocation19 + $0x80] sm:$0xf]
    %v1446 = vld [vmem:[#allocation19 + $0x84] sm:$0xff]
    %v1447 = vld [vmem:[#allocation19 + $0x8c] sm:$0xf]
    %v1448 = vld [vmem:[#allocation19 + $0x90] sm:$0xff]
    %v1449 = vld [vmem:[#allocation19 + $0x98] sm:$0xf]
    %v1450 = vld [vmem:[#allocation19 + $0x9c] sm:$0xff]
    %v1451 = vld [vmem:[#allocation19 + $0xa4] sm:$0xf]
    %v1452 = vld [vmem:[#allocation19 + $0xa8] sm:$0xff]
    %v1453 = vld [vmem:[#allocation19 + $0xb0] sm:$0xf]
    %v1454 = vld [vmem:[#allocation19 + $0xb4] sm:$0xff]
    %v1455 = vld [vmem:[#allocation19 + $0xbc] sm:$0xf]
    %v1456 = vld [vmem:[%s15] sm:$0x7]
    %v1458 = vlaneseq
    %v1459 = vshrl.u32 %v1458, 7
    %v1460 = vsub.s32 0, %v1459
    %v1461 = vrot.slane %v1456, %v1460
    %v1462 = vlaneseq
    %v1463 = vshrl.u32 %v1462, 7
    %v1464 = vsub.s32 1, %v1463
    %v1465 = vrot.slane %v1456, %v1464
    %v1466 = vlaneseq
    %v1467 = vshrl.u32 %v1466, 7
    %v1468 = vsub.s32 2, %v1467
    %v1469 = vrot.slane %v1456, %v1468
    %v1505 = vunpack.c.l.b16 %v1424
    %v1506 = vunpack.c.h.b16 %v1424
    %v1507 = vunpack.c.l.b16 %v1425
    %v1508 = vunpack.c.l.b16 %v1426
    %v1509 = vunpack.c.h.b16 %v1426
    %v1510 = vunpack.c.l.b16 %v1427
    %v1511 = vunpack.c.l.b16 %v1428
    %v1512 = vunpack.c.h.b16 %v1428
    %v1513 = vunpack.c.l.b16 %v1429
    %v1514 = vunpack.c.l.b16 %v1430
    %v1515 = vunpack.c.h.b16 %v1430
    %v1516 = vunpack.c.l.b16 %v1431
    %v1517 = vunpack.c.l.b16 %v1432
    %v1518 = vunpack.c.h.b16 %v1432
    %v1519 = vunpack.c.l.b16 %v1433
    %v1520 = vunpack.c.l.b16 %v1434
    %v1521 = vunpack.c.h.b16 %v1434
    %v1522 = vunpack.c.l.b16 %v1435
    %v1523 = vunpack.c.l.b16 %v1436
    %v1524 = vunpack.c.h.b16 %v1436
    %v1525 = vunpack.c.l.b16 %v1437
    %v1526 = vunpack.c.l.b16 %v1438
    %v1527 = vunpack.c.h.b16 %v1438
    %v1528 = vunpack.c.l.b16 %v1439
    %v1529 = vunpack.c.l.b16 %v1440
    %v1530 = vunpack.c.h.b16 %v1440
    %v1531 = vunpack.c.l.b16 %v1441
    %v1532 = vunpack.c.l.b16 %v1442
    %v1533 = vunpack.c.h.b16 %v1442
    %v1534 = vunpack.c.l.b16 %v1443
    %v1535 = vunpack.c.l.b16 %v1444
    %v1536 = vunpack.c.h.b16 %v1444
    %v1537 = vunpack.c.l.b16 %v1445
    %v1538 = vunpack.c.l.b16 %v1446
    %v1539 = vunpack.c.h.b16 %v1446
    %v1540 = vunpack.c.l.b16 %v1447
    %v1541 = vunpack.c.l.b16 %v1448
    %v1542 = vunpack.c.h.b16 %v1448
    %v1543 = vunpack.c.l.b16 %v1449
    %v1544 = vunpack.c.l.b16 %v1450
    %v1545 = vunpack.c.h.b16 %v1450
    %v1546 = vunpack.c.l.b16 %v1451
    %v1547 = vunpack.c.l.b16 %v1452
    %v1548 = vunpack.c.h.b16 %v1452
    %v1549 = vunpack.c.l.b16 %v1453
    %v1550 = vunpack.c.l.b16 %v1454
    %v1551 = vunpack.c.h.b16 %v1454
    %v1552 = vunpack.c.l.b16 %v1455
    %v1553 = vpack.c.b16 %v1508, %v1505
    %v1554 = vpack.c.b16 %v1509, %v1506
    %v1555 = vpack.c.b16 %v1510, %v1507
    %v1556 = vpack.c.b16 %v1514, %v1511
    %v1557 = vpack.c.b16 %v1515, %v1512
    %v1558 = vpack.c.b16 %v1516, %v1513
    %v1559 = vpack.c.b16 %v1520, %v1517
    %v1560 = vpack.c.b16 %v1521, %v1518
    %v1561 = vpack.c.b16 %v1522, %v1519
    %v1562 = vpack.c.b16 %v1526, %v1523
    %v1563 = vpack.c.b16 %v1527, %v1524
    %v1564 = vpack.c.b16 %v1528, %v1525
    %v1565 = vpack.c.b16 %v1532, %v1529
    %v1566 = vpack.c.b16 %v1533, %v1530
    %v1567 = vpack.c.b16 %v1534, %v1531
    %v1568 = vpack.c.b16 %v1538, %v1535
    %v1569 = vpack.c.b16 %v1539, %v1536
    %v1570 = vpack.c.b16 %v1540, %v1537
    %v1571 = vpack.c.b16 %v1544, %v1541
    %v1572 = vpack.c.b16 %v1545, %v1542
    %v1573 = vpack.c.b16 %v1546, %v1543
    %v1574 = vpack.c.b16 %v1550, %v1547
    %v1575 = vpack.c.b16 %v1551, %v1548
    %v1576 = vpack.c.b16 %v1552, %v1549
    %1601 = vmatprep.subr.bf16.mxu0 %v1575
    %1602 = vmatpush1.bf16.msra.mxu0 %v1574
    %1603 = vmatprep.subr.bf16.mxu0 %v1572
    %1604 = vmatpush1.bf16.msra.mxu0 %v1571
    %1605 = vmatprep.subr.bf16.mxu0 %v1569
    %1606 = vmatpush1.bf16.msra.mxu0 %v1568
    %1607 = vmatprep.subr.bf16.mxu0 %v1566
    %1608 = vmatpush1.bf16.msra.mxu0 %v1565
    %1609 = vmatprep.subr.bf16.mxu0 %v1563
    %1610 = vmatpush1.bf16.msra.mxu0 %v1562
    %1611 = vmatprep.subr.bf16.mxu0 %v1560
    %1612 = vmatpush1.bf16.msra.mxu0 %v1559
    %1613 = vmatprep.subr.bf16.mxu0 %v1557
    %1614 = vmatpush1.bf16.msra.mxu0 %v1556
    %1615 = vmatprep.subr.bf16.mxu0 %v1554
    %1616 = vmatpush1.bf16.msra.mxu0 %v1553
    %1617 = vmatprep.subr.bf16.mxu0 0
    %1618 = vmatpush2.bf16.msra.mxu0 0
    %1619 = vmatprep.subr.bf16.mxu0 0
    %1620 = vmatpush2.bf16.msra.mxu0 0
    %1621 = vmatprep.subr.bf16.mxu0 0
    %1622 = vmatpush2.bf16.msra.mxu0 0
    %1623 = vmatprep.subr.bf16.mxu0 0
    %1624 = vmatpush2.bf16.msra.mxu0 0
    %1625 = vmatprep.subr.bf16.mxu0 0
    %1626 = vmatpush2.bf16.msra.mxu0 0
    %1627 = vmatprep.subr.bf16.mxu0 0
    %1628 = vmatpush2.bf16.msra.mxu0 0
    %1629 = vmatprep.subr.bf16.mxu0 0
    %1630 = vmatpush2.bf16.msra.mxu0 0
    %1631 = vmatprep.subr.bf16.mxu0 0
    %1632 = vmatpush2.bf16.msra.mxu0 0
    %1633 = vmatprep.mubr.bf16.mxu0 0
    %1634 = vmatmul.mubr.bf16.gmra.mxu0 %v1423
    %v1635 = vpop.f32.mrf.mxu0
    %v1636 = vadd.f32 %v1461, %v1635
    %v1637 = vpop.f32.mrf.mxu0
    %v1638 = vadd.f32 %v1465, %v1637
    %v1639 = vpop.f32.mrf.mxu0
    %v1640 = vadd.f32 %v1461, %v1639
    %v1641 = vpop.f32.mrf.mxu0
    %v1642 = vadd.f32 %v1465, %v1641
    %1643 = vdwg.mxu0
    %1644 = vmatprep.subr.bf16.mxu0 0
    %1645 = vmatpush1.bf16.msra.mxu0 %v1576
    %1646 = vmatprep.subr.bf16.mxu0 0
    %1647 = vmatpush1.bf16.msra.mxu0 %v1573
    %1648 = vmatprep.subr.bf16.mxu0 0
    %1649 = vmatpush1.bf16.msra.mxu0 %v1570
    %1650 = vmatprep.subr.bf16.mxu0 0
    %1651 = vmatpush1.bf16.msra.mxu0 %v1567
    %1652 = vmatprep.subr.bf16.mxu0 0
    %1653 = vmatpush1.bf16.msra.mxu0 %v1564
    %1654 = vmatprep.subr.bf16.mxu0 0
    %1655 = vmatpush1.bf16.msra.mxu0 %v1561
    %1656 = vmatprep.subr.bf16.mxu0 0
    %1657 = vmatpush1.bf16.msra.mxu0 %v1558
    %1658 = vmatprep.subr.bf16.mxu0 0
    %1659 = vmatpush1.bf16.msra.mxu0 %v1555
    %1660 = vmatprep.subr.bf16.mxu0 0
    %1661 = vmatpush2.bf16.msra.mxu0 0
    %1662 = vmatprep.subr.bf16.mxu0 0
    %1663 = vmatpush2.bf16.msra.mxu0 0
    %1664 = vmatprep.subr.bf16.mxu0 0
    %1665 = vmatpush2.bf16.msra.mxu0 0
    %1666 = vmatprep.subr.bf16.mxu0 0
    %1667 = vmatpush2.bf16.msra.mxu0 0
    %1668 = vmatprep.subr.bf16.mxu0 0
    %1669 = vmatpush2.bf16.msra.mxu0 0
    %1670 = vmatprep.subr.bf16.mxu0 0
    %1671 = vmatpush2.bf16.msra.mxu0 0
    %1672 = vmatprep.subr.bf16.mxu0 0
    %1673 = vmatpush2.bf16.msra.mxu0 0
    %1674 = vmatprep.subr.bf16.mxu0 0
    %1675 = vmatpush2.bf16.msra.mxu0 0
    %1676 = vmatprep.mubr.bf16.mxu0 0
    %1677 = vmatmul.mubr.bf16.gmra.mxu0 %v1423
    %v1678 = vpop.f32.mrf.mxu0
    %v1679 = vadd.f32 %v1469, %v1678
    %v1680 = vpop.f32.mrf.mxu0
    %v1681 = vpop.f32.mrf.mxu0
    %v1682 = vadd.f32 %v1469, %v1681
    %v1683 = vpop.f32.mrf.mxu0
    %1684 = vdwg.mxu0
    %v1685 = vld [vmem:[#allocation20] sm:$0xff]
    %v1686 = vld [vmem:[#allocation20 + $0x8] sm:$0xf]
    %v1687 = vld [vmem:[#allocation20 + $0xc] sm:$0xff]
    %v1688 = vld [vmem:[#allocation20 + $0x14] sm:$0xf]
    %v1689 = vld [vmem:[#allocation20 + $0x18] sm:$0xff]
    %v1690 = vld [vmem:[#allocation20 + $0x20] sm:$0xf]
    %v1691 = vld [vmem:[#allocation20 + $0x24] sm:$0xff]
    %v1692 = vld [vmem:[#allocation20 + $0x2c] sm:$0xf]
    %v1693 = vld [vmem:[#allocation20 + $0x30] sm:$0xff]
    %v1694 = vld [vmem:[#allocation20 + $0x38] sm:$0xf]
    %v1695 = vld [vmem:[#allocation20 + $0x3c] sm:$0xff]
    %v1696 = vld [vmem:[#allocation20 + $0x44] sm:$0xf]
    %v1697 = vld [vmem:[#allocation20 + $0x48] sm:$0xff]
    %v1698 = vld [vmem:[#allocation20 + $0x50] sm:$0xf]
    %v1699 = vld [vmem:[#allocation20 + $0x54] sm:$0xff]
    %v1700 = vld [vmem:[#allocation20 + $0x5c] sm:$0xf]
    %v1701 = vld [vmem:[#allocation20 + $0x60] sm:$0xff]
    %v1702 = vld [vmem:[#allocation20 + $0x68] sm:$0xf]
    %v1703 = vld [vmem:[#allocation20 + $0x6c] sm:$0xff]
    %v1704 = vld [vmem:[#allocation20 + $0x74] sm:$0xf]
    %v1705 = vld [vmem:[#allocation20 + $0x78] sm:$0xff]
    %v1706 = vld [vmem:[#allocation20 + $0x80] sm:$0xf]
    %v1707 = vld [vmem:[#allocation20 + $0x84] sm:$0xff]
    %v1708 = vld [vmem:[#allocation20 + $0x8c] sm:$0xf]
    %v1709 = vld [vmem:[#allocation20 + $0x90] sm:$0xff]
    %v1710 = vld [vmem:[#allocation20 + $0x98] sm:$0xf]
    %v1711 = vld [vmem:[#allocation20 + $0x9c] sm:$0xff]
    %v1712 = vld [vmem:[#allocation20 + $0xa4] sm:$0xf]
    %v1713 = vld [vmem:[#allocation20 + $0xa8] sm:$0xff]
    %v1714 = vld [vmem:[#allocation20 + $0xb0] sm:$0xf]
    %v1715 = vld [vmem:[#allocation20 + $0xb4] sm:$0xff]
    %v1716 = vld [vmem:[#allocation20 + $0xbc] sm:$0xf]
    %v1717 = vld [vmem:[%s16] sm:$0x7]
    %v1719 = vlaneseq
    %v1720 = vshrl.u32 %v1719, 7
    %v1721 = vsub.s32 0, %v1720
    %v1722 = vrot.slane %v1717, %v1721
    %v1723 = vlaneseq
    %v1724 = vshrl.u32 %v1723, 7
    %v1725 = vsub.s32 1, %v1724
    %v1726 = vrot.slane %v1717, %v1725
    %v1727 = vlaneseq
    %v1728 = vshrl.u32 %v1727, 7
    %v1729 = vsub.s32 2, %v1728
    %v1730 = vrot.slane %v1717, %v1729
    %v1734 = vunpack.c.l.b16 %v236
    %v1735 = vunpack.c.l.b16 %v238
    %v1736 = vpack.c.b16 %v1735, %v1734
    %v1770 = vunpack.c.l.b16 %v1685
    %v1771 = vunpack.c.h.b16 %v1685
    %v1772 = vunpack.c.l.b16 %v1686
    %v1773 = vunpack.c.l.b16 %v1687
    %v1774 = vunpack.c.h.b16 %v1687
    %v1775 = vunpack.c.l.b16 %v1688
    %v1776 = vunpack.c.l.b16 %v1689
    %v1777 = vunpack.c.h.b16 %v1689
    %v1778 = vunpack.c.l.b16 %v1690
    %v1779 = vunpack.c.l.b16 %v1691
    %v1780 = vunpack.c.h.b16 %v1691
    %v1781 = vunpack.c.l.b16 %v1692
    %v1782 = vunpack.c.l.b16 %v1693
    %v1783 = vunpack.c.h.b16 %v1693
    %v1784 = vunpack.c.l.b16 %v1694
    %v1785 = vunpack.c.l.b16 %v1695
    %v1786 = vunpack.c.h.b16 %v1695
    %v1787 = vunpack.c.l.b16 %v1696
    %v1788 = vunpack.c.l.b16 %v1697
    %v1789 = vunpack.c.h.b16 %v1697
    %v1790 = vunpack.c.l.b16 %v1698
    %v1791 = vunpack.c.l.b16 %v1699
    %v1792 = vunpack.c.h.b16 %v1699
    %v1793 = vunpack.c.l.b16 %v1700
    %v1794 = vunpack.c.l.b16 %v1701
    %v1795 = vunpack.c.h.b16 %v1701
    %v1796 = vunpack.c.l.b16 %v1702
    %v1797 = vunpack.c.l.b16 %v1703
    %v1798 = vunpack.c.h.b16 %v1703
    %v1799 = vunpack.c.l.b16 %v1704
    %v1800 = vunpack.c.l.b16 %v1705
    %v1801 = vunpack.c.h.b16 %v1705
    %v1802 = vunpack.c.l.b16 %v1706
    %v1803 = vunpack.c.l.b16 %v1707
    %v1804 = vunpack.c.h.b16 %v1707
    %v1805 = vunpack.c.l.b16 %v1708
    %v1806 = vunpack.c.l.b16 %v1709
    %v1807 = vunpack.c.h.b16 %v1709
    %v1808 = vunpack.c.l.b16 %v1710
    %v1809 = vunpack.c.l.b16 %v1711
    %v1810 = vunpack.c.h.b16 %v1711
    %v1811 = vunpack.c.l.b16 %v1712
    %v1812 = vunpack.c.l.b16 %v1713
    %v1813 = vunpack.c.h.b16 %v1713
    %v1814 = vunpack.c.l.b16 %v1714
    %v1815 = vunpack.c.l.b16 %v1715
    %v1816 = vunpack.c.h.b16 %v1715
    %v1817 = vunpack.c.l.b16 %v1716
    %v1818 = vpack.c.b16 %v1773, %v1770
    %v1819 = vpack.c.b16 %v1774, %v1771
    %v1820 = vpack.c.b16 %v1775, %v1772
    %v1821 = vpack.c.b16 %v1779, %v1776
    %v1822 = vpack.c.b16 %v1780, %v1777
    %v1823 = vpack.c.b16 %v1781, %v1778
    %v1824 = vpack.c.b16 %v1785, %v1782
    %v1825 = vpack.c.b16 %v1786, %v1783
    %v1826 = vpack.c.b16 %v1787, %v1784
    %v1827 = vpack.c.b16 %v1791, %v1788
    %v1828 = vpack.c.b16 %v1792, %v1789
    %v1829 = vpack.c.b16 %v1793, %v1790
    %v1830 = vpack.c.b16 %v1797, %v1794
    %v1831 = vpack.c.b16 %v1798, %v1795
    %v1832 = vpack.c.b16 %v1799, %v1796
    %v1833 = vpack.c.b16 %v1803, %v1800
    %v1834 = vpack.c.b16 %v1804, %v1801
    %v1835 = vpack.c.b16 %v1805, %v1802
    %v1836 = vpack.c.b16 %v1809, %v1806
    %v1837 = vpack.c.b16 %v1810, %v1807
    %v1838 = vpack.c.b16 %v1811, %v1808
    %v1839 = vpack.c.b16 %v1815, %v1812
    %v1840 = vpack.c.b16 %v1816, %v1813
    %v1841 = vpack.c.b16 %v1817, %v1814
    %1866 = vmatprep.subr.bf16.mxu0 %v1840
    %1867 = vmatpush1.bf16.msra.mxu0 %v1839
    %1868 = vmatprep.subr.bf16.mxu0 %v1837
    %1869 = vmatpush1.bf16.msra.mxu0 %v1836
    %1870 = vmatprep.subr.bf16.mxu0 %v1834
    %1871 = vmatpush1.bf16.msra.mxu0 %v1833
    %1872 = vmatprep.subr.bf16.mxu0 %v1831
    %1873 = vmatpush1.bf16.msra.mxu0 %v1830
    %1874 = vmatprep.subr.bf16.mxu0 %v1828
    %1875 = vmatpush1.bf16.msra.mxu0 %v1827
    %1876 = vmatprep.subr.bf16.mxu0 %v1825
    %1877 = vmatpush1.bf16.msra.mxu0 %v1824
    %1878 = vmatprep.subr.bf16.mxu0 %v1822
    %1879 = vmatpush1.bf16.msra.mxu0 %v1821
    %1880 = vmatprep.subr.bf16.mxu0 %v1819
    %1881 = vmatpush1.bf16.msra.mxu0 %v1818
    %1882 = vmatprep.subr.bf16.mxu0 0
    %1883 = vmatpush2.bf16.msra.mxu0 0
    %1884 = vmatprep.subr.bf16.mxu0 0
    %1885 = vmatpush2.bf16.msra.mxu0 0
    %1886 = vmatprep.subr.bf16.mxu0 0
    %1887 = vmatpush2.bf16.msra.mxu0 0
    %1888 = vmatprep.subr.bf16.mxu0 0
    %1889 = vmatpush2.bf16.msra.mxu0 0
    %1890 = vmatprep.subr.bf16.mxu0 0
    %1891 = vmatpush2.bf16.msra.mxu0 0
    %1892 = vmatprep.subr.bf16.mxu0 0
    %1893 = vmatpush2.bf16.msra.mxu0 0
    %1894 = vmatprep.subr.bf16.mxu0 0
    %1895 = vmatpush2.bf16.msra.mxu0 0
    %1896 = vmatprep.subr.bf16.mxu0 0
    %1897 = vmatpush2.bf16.msra.mxu0 0
    %1898 = vmatprep.mubr.bf16.mxu0 0
    %1899 = vmatmul.mubr.bf16.gmra.mxu0 %v1736
    %v1900 = vpop.f32.mrf.mxu0
    %v1901 = vadd.f32 %v1722, %v1900
    %v1902 = vpop.f32.mrf.mxu0
    %v1903 = vadd.f32 %v1726, %v1902
    %v1904 = vpop.f32.mrf.mxu0
    %v1905 = vadd.f32 %v1722, %v1904
    %v1906 = vpop.f32.mrf.mxu0
    %v1907 = vadd.f32 %v1726, %v1906
    %1908 = vdwg.mxu0
    %1909 = vmatprep.subr.bf16.mxu0 0
    %1910 = vmatpush1.bf16.msra.mxu0 %v1841
    %1911 = vmatprep.subr.bf16.mxu0 0
    %1912 = vmatpush1.bf16.msra.mxu0 %v1838
    %1913 = vmatprep.subr.bf16.mxu0 0
    %1914 = vmatpush1.bf16.msra.mxu0 %v1835
    %1915 = vmatprep.subr.bf16.mxu0 0
    %1916 = vmatpush1.bf16.msra.mxu0 %v1832
    %1917 = vmatprep.subr.bf16.mxu0 0
    %1918 = vmatpush1.bf16.msra.mxu0 %v1829
    %1919 = vmatprep.subr.bf16.mxu0 0
    %1920 = vmatpush1.bf16.msra.mxu0 %v1826
    %1921 = vmatprep.subr.bf16.mxu0 0
    %1922 = vmatpush1.bf16.msra.mxu0 %v1823
    %1923 = vmatprep.subr.bf16.mxu0 0
    %1924 = vmatpush1.bf16.msra.mxu0 %v1820
    %1925 = vmatprep.subr.bf16.mxu0 0
    %1926 = vmatpush2.bf16.msra.mxu0 0
    %1927 = vmatprep.subr.bf16.mxu0 0
    %1928 = vmatpush2.bf16.msra.mxu0 0
    %1929 = vmatprep.subr.bf16.mxu0 0
    %1930 = vmatpush2.bf16.msra.mxu0 0
    %1931 = vmatprep.subr.bf16.mxu0 0
    %1932 = vmatpush2.bf16.msra.mxu0 0
    %1933 = vmatprep.subr.bf16.mxu0 0
    %1934 = vmatpush2.bf16.msra.mxu0 0
    %1935 = vmatprep.subr.bf16.mxu0 0
    %1936 = vmatpush2.bf16.msra.mxu0 0
    %1937 = vmatprep.subr.bf16.mxu0 0
    %1938 = vmatpush2.bf16.msra.mxu0 0
    %1939 = vmatprep.subr.bf16.mxu0 0
    %1940 = vmatpush2.bf16.msra.mxu0 0
    %1941 = vmatprep.mubr.bf16.mxu0 0
    %1942 = vmatmul.mubr.bf16.gmra.mxu0 %v1736
    %v1943 = vpop.f32.mrf.mxu0
    %v1944 = vadd.f32 %v1730, %v1943
    %v1945 = vpop.f32.mrf.mxu0
    %v1946 = vpop.f32.mrf.mxu0
    %v1947 = vadd.f32 %v1730, %v1946
    %v1948 = vpop.f32.mrf.mxu0
    %1949 = vdwg.mxu0
    %v1950 = vadd.f32 %v1636, %v1901
    %v1951 = vadd.f32 %v1640, %v1905
    %v1952 = vmul.f32 %v1950, 0.5
    %v1953 = vmul.f32 %v1951, 0.5
    %v1954 = vtanh.pop %v1952
    %v1955 = vtanh.pop %v1953
    %v1956 = vmul.f32 %v1954, 0.5
    %v1957 = vmul.f32 %v1955, 0.5
    %v1958 = vadd.f32 %v1956, 0.5
    %v1959 = vadd.f32 %v1957, 0.5
    %v1960 = vadd.f32 %v1638, %v1903
    %v1961 = vadd.f32 %v1642, %v1907
    %v1962 = vmul.f32 %v1960, 0.5
    %v1963 = vmul.f32 %v1961, 0.5
    %v1964 = vtanh.pop %v1962
    %v1965 = vtanh.pop %v1963
    %v1966 = vmul.f32 %v1964, 0.5
    %v1967 = vmul.f32 %v1965, 0.5
    %v1968 = vadd.f32 %v1966, 0.5
    %v1969 = vadd.f32 %v1967, 0.5
    %v1970 = vmul.f32 %v1958, %v1944
    %v1971 = vmul.f32 %v1959, %v1947
    %v1972 = vadd.f32 %v1679, %v1970
    %v1973 = vadd.f32 %v1682, %v1971
    %v1974 = vtanh.pop %v1972
    %v1975 = vtanh.pop %v1973
    %v1976 = vsub.f32 1.0, %v1968
    %v1977 = vsub.f32 1.0, %v1969
    %v1978 = vmul.f32 %v1976, %v1974
    %v1979 = vmul.f32 %v1977, %v1975
    %v1980 = vunpack.c.l.bf16 %v236
    %v1981 = vunpack.c.l.bf16 %v238
    %v1982 = vmul.f32 %v1968, %v1980
    %v1983 = vmul.f32 %v1969, %v1981
    %v1984 = vadd.f32 %v1978, %v1982
    %v1985 = vadd.f32 %v1979, %v1983
    %v1986 = vmul.f32 %v1984, %v245
    %v1987 = vmul.f32 %v1985, %v246
    %v1988 = vpack.c.bf16 %v1987, %v1986
    %v1989 = vld [vmem:[#allocation22] sm:$0xf]
    %v1990 = vld [vmem:[#allocation22 + $0x4] sm:$0xf]
    %v1991 = vld [vmem:[#allocation22 + $0x8] sm:$0xf]
    %v1992 = vld [vmem:[#allocation22 + $0xc] sm:$0xf]
    %v1993 = vld [vmem:[#allocation22 + $0x10] sm:$0xf]
    %v1994 = vld [vmem:[#allocation22 + $0x14] sm:$0xf]
    %v1995 = vld [vmem:[#allocation22 + $0x18] sm:$0xf]
    %v1996 = vld [vmem:[#allocation22 + $0x1c] sm:$0xf]
    %v1997 = vld [vmem:[#allocation22 + $0x20] sm:$0xf]
    %v1998 = vld [vmem:[#allocation22 + $0x24] sm:$0xf]
    %v1999 = vld [vmem:[#allocation22 + $0x28] sm:$0xf]
    %v2000 = vld [vmem:[#allocation22 + $0x2c] sm:$0xf]
    %v2001 = vld [vmem:[#allocation22 + $0x30] sm:$0xf]
    %v2002 = vld [vmem:[#allocation22 + $0x34] sm:$0xf]
    %v2003 = vld [vmem:[#allocation22 + $0x38] sm:$0xf]
    %v2004 = vld [vmem:[#allocation22 + $0x3c] sm:$0xf]
    %v2005 = vld [vmem:[%s18] sm:$0x1]
    %v2007 = vlaneseq
    %v2008 = vshrl.u32 %v2007, 7
    %v2009 = vsub.s32 0, %v2008
    %v2010 = vrot.slane %v2005, %v2009
    %v2028 = vunpack.c.l.b16 %v1989
    %v2029 = vunpack.c.l.b16 %v1990
    %v2030 = vunpack.c.l.b16 %v1991
    %v2031 = vunpack.c.l.b16 %v1992
    %v2032 = vunpack.c.l.b16 %v1993
    %v2033 = vunpack.c.l.b16 %v1994
    %v2034 = vunpack.c.l.b16 %v1995
    %v2035 = vunpack.c.l.b16 %v1996
    %v2036 = vunpack.c.l.b16 %v1997
    %v2037 = vunpack.c.l.b16 %v1998
    %v2038 = vunpack.c.l.b16 %v1999
    %v2039 = vunpack.c.l.b16 %v2000
    %v2040 = vunpack.c.l.b16 %v2001
    %v2041 = vunpack.c.l.b16 %v2002
    %v2042 = vunpack.c.l.b16 %v2003
    %v2043 = vunpack.c.l.b16 %v2004
    %v2044 = vpack.c.b16 %v2029, %v2028
    %v2045 = vpack.c.b16 %v2031, %v2030
    %v2046 = vpack.c.b16 %v2033, %v2032
    %v2047 = vpack.c.b16 %v2035, %v2034
    %v2048 = vpack.c.b16 %v2037, %v2036
    %v2049 = vpack.c.b16 %v2039, %v2038
    %v2050 = vpack.c.b16 %v2041, %v2040
    %v2051 = vpack.c.b16 %v2043, %v2042
    %2060 = vmatprep.subr.bf16.mxu0 0
    %2061 = vmatpush1.bf16.msra.mxu0 %v2051
    %2062 = vmatprep.subr.bf16.mxu0 0
    %2063 = vmatpush1.bf16.msra.mxu0 %v2050
    %2064 = vmatprep.subr.bf16.mxu0 0
    %2065 = vmatpush1.bf16.msra.mxu0 %v2049
    %2066 = vmatprep.subr.bf16.mxu0 0
    %2067 = vmatpush1.bf16.msra.mxu0 %v2048
    %2068 = vmatprep.subr.bf16.mxu0 0
    %2069 = vmatpush1.bf16.msra.mxu0 %v2047
    %2070 = vmatprep.subr.bf16.mxu0 0
    %2071 = vmatpush1.bf16.msra.mxu0 %v2046
    %2072 = vmatprep.subr.bf16.mxu0 0
    %2073 = vmatpush1.bf16.msra.mxu0 %v2045
    %2074 = vmatprep.subr.bf16.mxu0 0
    %2075 = vmatpush1.bf16.msra.mxu0 %v2044
    %2076 = vmatprep.subr.bf16.mxu0 0
    %2077 = vmatpush2.bf16.msra.mxu0 0
    %2078 = vmatprep.subr.bf16.mxu0 0
    %2079 = vmatpush2.bf16.msra.mxu0 0
    %2080 = vmatprep.subr.bf16.mxu0 0
    %2081 = vmatpush2.bf16.msra.mxu0 0
    %2082 = vmatprep.subr.bf16.mxu0 0
    %2083 = vmatpush2.bf16.msra.mxu0 0
    %2084 = vmatprep.subr.bf16.mxu0 0
    %2085 = vmatpush2.bf16.msra.mxu0 0
    %2086 = vmatprep.subr.bf16.mxu0 0
    %2087 = vmatpush2.bf16.msra.mxu0 0
    %2088 = vmatprep.subr.bf16.mxu0 0
    %2089 = vmatpush2.bf16.msra.mxu0 0
    %2090 = vmatprep.subr.bf16.mxu0 0
    %2091 = vmatpush2.bf16.msra.mxu0 0
    %2092 = vmatprep.mubr.bf16.mxu0 0
    %2093 = vmatmul.mubr.bf16.gmra.mxu0 %v1988
    %v2094 = vpop.f32.mrf.mxu0
    %v2095 = vadd.f32 %v2010, %v2094
    %v2096 = vpop.f32.mrf.mxu0
    %v2097 = vpop.f32.mrf.mxu0
    %v2098 = vadd.f32 %v2010, %v2097
    %v2099 = vpop.f32.mrf.mxu0
    %2100 = vdwg.mxu0
    %v2101 = vld [vmem:[%s19] sm:$0x1]
    %v2103 = vlaneseq
    %v2104 = vshrl.u32 %v2103, 7
    %v2105 = vsub.s32 0, %v2104
    %v2106 = vrot.slane %v2101, %v2105
    %v2108 = vadd.f32 %v2095, %v2106
    %v2109 = vadd.f32 %v2098, %v2106
    %v2110 = vmul.f32 %v2108, 0.5
    %v2111 = vmul.f32 %v2109, 0.5
    %v2112 = vtanh.pop %v2110
    %v2113 = vtanh.pop %v2111
    %v2114 = vmul.f32 %v2112, 0.5
    %v2115 = vmul.f32 %v2113, 0.5
    %v2116 = vadd.f32 %v2114, 0.5
    %v2117 = vadd.f32 %v2115, 0.5
    %2118 = vrot.lane.b32.xlu0 %v2116, 8
    %v2119 = vpop.permute.xlu0 %2118
    %2120 = vrot.lane.b32.xlu0 %v2117, 8
    %v2121 = vpop.permute.xlu0 %2120
    %2122 = vrot.lane.b32.xlu0 %v2116, 4
    %v2123 = vpop.permute.xlu0 %2122
    %2124 = vrot.lane.b32.xlu0 %v2117, 4
    %v2125 = vpop.permute.xlu0 %2124
    %v2126 = vmul.f32 %v2119, %v2106
    %v2127 = vmul.f32 %v2121, %v2106
    %v2128 = vadd.f32 %v2095, %v2126
    %v2129 = vadd.f32 %v2098, %v2127
    %v2130 = vtanh.pop %v2128
    %v2131 = vtanh.pop %v2129
    %v2132 = vsub.f32 1.0, %v2123
    %v2133 = vsub.f32 1.0, %v2125
    %v2134 = vmul.f32 %v2132, %v2130
    %v2135 = vmul.f32 %v2133, %v2131
    %v2136 = vadd.f32 %v2134, %v855
    %v2137 = vadd.f32 %v2135, %v856
    %2138 = vst [vmem:[#allocation23] sm:$0xff] %v2136
    %2139 = vst [vmem:[#allocation23 + $0x8] sm:$0xff] %v2137
    // Predicated region
    $region134: #{tpu_custom_call.1} parent=1 // pred_check
      _
    $region135: #{tpu_custom_call.1} parent=1 // pred_check_branch
      %2141 = sbr.rel (0) target = $region137
    $region136: #{tpu_custom_call.1} parent=1 // pred_region
      %s2143 = ssub.s32 256, 256
      %2144 = vsyncadd [#allocation4], %s2143
      %s2145 = sshll.u32 [#allocation23], 4
      %s2146 = int_to_ptr.vmem [resolvable:$true] %s2145
      %2151 = dma.vmem_to_hbm [thread:$0]  %s2146, 256, %s20, [#allocation4], 128, 128, 8
    $region137: #{tpu_custom_call.1} parent=1 // pred_fallthru
      _
    // Predicated region
    $region138: #{tpu_custom_call.1} parent=1 // pred_check
      _
    $region139: #{tpu_custom_call.1} parent=1 // pred_check_branch
      %2153 = sbr.rel (0) target = $region141
    $region140: #{tpu_custom_call.1} parent=1 // pred_region
      %2154 = dma.done [#allocation4], 256
    $region141: #{tpu_custom_call.1} parent=1 // pred_fallthru
      _
    %2155 = vsyncpa [#allocation3], 1
    %2156 = vsyncpa [#allocation6], 1
    %2157 = vsyncpa [#allocation9], 1
    %2158 = vsyncpa [#allocation12], 1
    %2159 = vsyncpa [#allocation15], 1
    %2160 = vsyncpa [#allocation18], 1
    %2161 = vsyncpa [#allocation21], 1
    %2162 = vsyncpa [#allocation4], 1

</llo_original>
